<compile_context>
chip_gen: v7x
topology: tpu7x:2x2x1
jax: 0.10.0
libtpu: 0.0.40
codegen_flags: <defaults>
</compile_context>

<pallas_src>
import functools
import numpy as np
import jax
import jax.numpy as jnp
from jax import lax
from jax.experimental import pallas as pl
from jax.experimental.pallas import tpu as pltpu


def _round_up(x, m):
    return (x + m - 1) // m * m


# ----------------------------------------------------------------------------
# Pallas kernel: batched highway chain-LSTM recurrence over one T-tile.
# ----------------------------------------------------------------------------
def chain_lstm_kernel(x_ref, wxp_ref, bxp_ref, wh_ref, out_ref,
                      xg_sc, c_sc, h_sc, *, batch, tile_t, hp):
    # x_ref  : VMEM f32 [tile_t*B, Fp]   step-major features (row = t*B + b)
    # wxp_ref: VMEM f32 [Fp, 6*Hp]       fused (i,o,f,u,r,px) input weights, 0-padded
    # bxp_ref: VMEM f32 [1, 6*Hp]        fused biases (bx+bh per gate, forget +1; bp)
    # wh_ref : VMEM f32 [Hp, 5*Hp]       fused recurrent weights, 0-padded
    # out_ref: VMEM f32 [tile_t*B, Hp]   hidden states (lane-padded)
    # xg_sc  : VMEM f32 [tile_t*B, 6*Hp] scratch for precomputed input contributions
    # c_sc/h_sc : VMEM f32 [B, Hp]       recurrent state (persists across T grid)

    @pl.when(pl.program_id(0) == 0)
    def _():
        c_sc[...] = jnp.zeros_like(c_sc)
        h_sc[...] = jnp.zeros_like(h_sc)

    # One big MXU matmul for every step of this tile (gates + highway branch,
    # biases folded in); staged in VMEM so it is not live in vregs across the
    # sequential loop.
    xg_sc[...] = (jnp.dot(x_ref[...], wxp_ref[...],
                          preferred_element_type=jnp.float32) + bxp_ref[...])

    def step(t, carry):
        row = pl.multiple_of(t * batch, batch)
        xg = xg_sc[pl.ds(row, batch), :]                      # [B, 6*Hp]
        # Single fused recurrent matmul for all five gates.
        hg = jnp.dot(h_sc[...], wh_ref[...],
                     preferred_element_type=jnp.float32)      # [B, 5*Hp]
        g = xg[:, :5 * hp] + hg
        i = jax.nn.sigmoid(g[:, 0 * hp:1 * hp])
        o = jax.nn.sigmoid(g[:, 1 * hp:2 * hp])
        f = jax.nn.sigmoid(g[:, 2 * hp:3 * hp])
        u = jnp.tanh(g[:, 3 * hp:4 * hp])
        r = jax.nn.sigmoid(g[:, 4 * hp:5 * hp])
        px = xg[:, 5 * hp:6 * hp]

        c = i * u + f * c_sc[...]
        h = o * jnp.tanh(c)
        h_final = r * h + (1.0 - r) * px

        c_sc[...] = c
        h_sc[...] = h_final
        out_ref[pl.ds(row, batch), :] = h_final               # full-sublane, 128-lane store
        return carry

    # tile_t is small by construction (<= 16): fully unroll for LLO scheduling.
    lax.fori_loop(0, tile_t, step, 0, unroll=True)


def run_chain_lstm(x_steps, wxp, bxp, whf, *, batch, l_pad, tile_t, hp, fp, gdim):
    num_tiles = l_pad // tile_t
    kernel = functools.partial(chain_lstm_kernel,
                               batch=batch, tile_t=tile_t, hp=hp)
    return pl.pallas_call(
        kernel,
        out_shape=jax.ShapeDtypeStruct((l_pad * batch, hp), jnp.float32),
        grid_spec=pltpu.PrefetchScalarGridSpec(
            num_scalar_prefetch=0,
            grid=(num_tiles,),
            in_specs=[
                pl.BlockSpec((tile_t * batch, fp), lambda i: (i, 0)),
                pl.BlockSpec((fp, gdim), lambda i: (0, 0)),
                pl.BlockSpec((1, gdim), lambda i: (0, 0)),
                pl.BlockSpec((hp, 5 * hp), lambda i: (0, 0)),
            ],
            out_specs=pl.BlockSpec((tile_t * batch, hp), lambda i: (i, 0)),
            scratch_shapes=[
                pltpu.VMEM((tile_t * batch, gdim), jnp.float32),
                pltpu.VMEM((batch, hp), jnp.float32),
                pltpu.VMEM((batch, hp), jnp.float32),
            ]),
        compiler_params=pltpu.CompilerParams(
            dimension_semantics=("arbitrary",)),
    )(x_steps, wxp, bxp, whf)


# ----------------------------------------------------------------------------
# Glue: forest traversal -> independent chains (mirrors ChainLSTM.forward order
# within a chain; chains themselves are independent, so batch order is free).
# ----------------------------------------------------------------------------
def build_chains(forest, direction):
    chains = []

    def visit(tree):
        children = tree["children"]
        for ch in children:            # recurse first (same as the PyTorch code)
            visit(ch)
        n = len(children)
        if n >= 1:
            it = range(n) if direction == "foreward" else range(n - 1, -1, -1)
            chains.append([children[i]["index"] for i in it])

    for tree in forest:
        visit(tree)
    return chains


def build_fused_weights(params, Fp, Hp):
    wx = np.asarray(params["wx"], np.float32)   # [5, F, H]  gate order i,o,f,u,r
    wh = np.asarray(params["wh"], np.float32)   # [5, H, H]
    wp = np.asarray(params["wp"], np.float32)   # [F, H]
    b = np.asarray(params["b"], np.float32)     # [5, 1, H]  (bx + bh folded)
    bp = np.asarray(params["bp"], np.float32)   # [1, H]
    F, H = wp.shape

    wxp = np.zeros((Fp, 6 * Hp), np.float32)
    bxp = np.zeros((1, 6 * Hp), np.float32)
    whf = np.zeros((Hp, 5 * Hp), np.float32)
    for g in range(5):
        wxp[:F, g * Hp:g * Hp + H] = wx[g]
        whf[:H, g * Hp:g * Hp + H] = wh[g]
        bxp[0, g * Hp:g * Hp + H] = b[g, 0]
    wxp[:F, 5 * Hp:5 * Hp + H] = wp            # highway branch folded in
    bxp[0, 5 * Hp:5 * Hp + H] = bp[0]
    return jnp.asarray(wxp), jnp.asarray(bxp), jnp.asarray(whf)


def one_directional_chain_lstm(forest, features, num_obj, params,
                               direction="foreward"):
    chains = build_chains(forest, direction)
    assert sum(len(c) for c in chains) == num_obj, \
        "every object must appear exactly once as a child"

    B_raw = len(chains)
    L = max(len(c) for c in chains)
    tile_t = min(L, 16)
    L_pad = _round_up(L, tile_t)
    B = _round_up(max(B_raw, 1), 8)            # f32 sublane multiple

    F = features.shape[1]
    H = params["h_dim"]
    Fp = _round_up(F, 128)
    Hp = _round_up(H, 128)
    G = 6 * Hp

    feats_np = np.asarray(features, np.float32)
    # Step-major packing: row = t*B + b.  Padded rows/steps are zero features;
    # they produce finite values that are never gathered.
    x_np = np.zeros((L_pad * B, Fp), np.float32)
    gather_idx = np.zeros(num_obj, np.int32)
    for b_i, chain in enumerate(chains):
        for t, obj in enumerate(chain):
            x_np[t * B + b_i, :F] = feats_np[obj]
            gather_idx[obj] = t * B + b_i

    wxp, bxp, whf = build_fused_weights(params, Fp, Hp)

    h_flat = run_chain_lstm(jnp.asarray(x_np), wxp, bxp, whf,
                            batch=B, l_pad=L_pad, tile_t=tile_t,
                            hp=Hp, fp=Fp, gdim=G)

    # torch.index_select equivalent: recover original object-index order, drop
    # the lane padding.
    return jnp.take(h_flat, jnp.asarray(gather_idx), axis=0)[:, :H]


# ----------------------------------------------------------------------------
# Pure-JAX reference (compact weights, per-chain recurrence) for sanity check.
# ----------------------------------------------------------------------------
def reference_forward(forest, features, num_obj, params, direction="foreward"):
    chains = build_chains(forest, direction)
    H = params["h_dim"]
    wx, wh, wp = params["wx"], params["wh"], params["wp"]
    b, bp = params["b"], params["bp"]
    feats = np.asarray(features, np.float32)
    out = np.zeros((num_obj, H), np.float32)
    for chain in chains:
        c = jnp.zeros((1, H), jnp.float32)
        h = jnp.zeros((1, H), jnp.float32)
        for obj in chain:
            x = jnp.asarray(feats[obj:obj + 1])
            g = [x @ wx[k] + b[k] + h @ wh[k] for k in range(5)]
            i, o, f = jax.nn.sigmoid(g[0]), jax.nn.sigmoid(g[1]), jax.nn.sigmoid(g[2])
            u, r = jnp.tanh(g[3]), jax.nn.sigmoid(g[4])
            c = i * u + f * c
            hh = o * jnp.tanh(c)
            h = r * hh + (1.0 - r) * (x @ wp + bp)
            out[obj] = np.asarray(h[0])
    return jnp.asarray(out)


# ----------------------------------------------------------------------------
def make_params(key, feat_dim, h_dim):
    k1, k2, k3 = jax.random.split(key, 3)
    wx = 0.1 * jax.random.normal(k1, (5, feat_dim, h_dim), jnp.float32)
    wh = 0.1 * jax.random.normal(k2, (5, h_dim, h_dim), jnp.float32)
    wp = 0.1 * jax.random.normal(k3, (feat_dim, h_dim), jnp.float32)
    # biases: ioffux.bias = 0, ioffuh.bias = 0 except forget gate (index 2) = 1
    b = jnp.zeros((5, 1, h_dim), jnp.float32).at[2].set(1.0)
    bp = jnp.zeros((1, h_dim), jnp.float32)
    return {"wx": wx, "wh": wh, "wp": wp, "b": b, "bp": bp, "h_dim": h_dim}


def node(idx, children=()):
    return {"index": idx, "children": list(children)}


if __name__ == "__main__":
    feat_dim, h_dim, num_obj = 64, 32, 8
    key = jax.random.PRNGKey(0)
    kf_, kp_ = jax.random.split(key)
    features = jax.random.normal(kf_, (num_obj, feat_dim), jnp.float32)
    params = make_params(kp_, feat_dim, h_dim)

    # Small forest of two trees (dummy roots carry no feature); chains are the
    # child lists: [3,4] (children of node 1), [0,1,2], [5,6,7].
    forest = [
        node(None, [node(0), node(1, [node(3), node(4)]), node(2)]),
        node(None, [node(5), node(6), node(7)]),
    ]

    out = one_directional_chain_lstm(forest, features, num_obj, params,
                                     direction="foreward")
    out = jax.block_until_ready(out)

    ref = reference_forward(forest, features, num_obj, params,
                            direction="foreward")
    np.testing.assert_allclose(np.asarray(out), np.asarray(ref),
                               rtol=2e-3, atol=2e-3)

    assert out.shape == (num_obj, h_dim)
    print("KERNEL_OK")
</pallas_src>

<mosaic_0001>
module attributes {stable_mosaic.version = 11 : i64} {
  func.func @chain_lstm_kernel(%arg0: i32, %arg1: memref<24x128xf32, #tpu.memory_space<vmem>>, %arg2: memref<128x768xf32, #tpu.memory_space<vmem>>, %arg3: memref<1x768xf32, #tpu.memory_space<vmem>>, %arg4: memref<128x640xf32, #tpu.memory_space<vmem>>, %arg5: memref<24x128xf32, #tpu.memory_space<vmem>>, %arg6: memref<24x768xf32, #tpu.memory_space<vmem>>, %arg7: memref<8x128xf32, #tpu.memory_space<vmem>>, %arg8: memref<8x128xf32, #tpu.memory_space<vmem>>) attributes {dimension_semantics = [#tpu.dimension_semantics<arbitrary>], iteration_bounds = array<i64: 1>, scalar_prefetch = 0 : i64, scratch_operands = 3 : i64, tpu.core_type = #tpu.core_type<tc>, window_params = [{transform_indices = @transform_0, window_bounds = array<i64: 24, 128>}, {pipeline_mode = #tpu.pipeline_mode<synchronous>, transform_indices = @transform_1, window_bounds = array<i64: 128, 768>}, {pipeline_mode = #tpu.pipeline_mode<synchronous>, transform_indices = @transform_2, window_bounds = array<i64: 1, 768>}, {pipeline_mode = #tpu.pipeline_mode<synchronous>, transform_indices = @transform_3, window_bounds = array<i64: 128, 640>}, {transform_indices = @transform_4, window_bounds = array<i64: 24, 128>}]} {
    %c0_i32 = arith.constant 0 : i32
    %0 = arith.cmpi eq, %arg0, %c0_i32 : i32
    %1 = arith.extui %0 : i1 to i32
    %c0_i32_0 = arith.constant 0 : i32
    %2 = arith.cmpi ne, %1, %c0_i32_0 : i32
    scf.if %2 {
      %cst_65 = arith.constant 0.000000e+00 : f32
      %163 = vector.broadcast %cst_65 : f32 to vector<8x128xf32>
      %c0_66 = arith.constant 0 : index
      %c0_67 = arith.constant 0 : index
      %164 = vector.load %arg7[%c0_66, %c0_67] : memref<8x128xf32, #tpu.memory_space<vmem>>, vector<8x128xf32>
      tpu.vector_store %arg7[%c0_66, %c0_67], %163 {strides = array<i32>} : memref<8x128xf32, #tpu.memory_space<vmem>>, vector<8x128xf32>,
      %cst_68 = arith.constant 0.000000e+00 : f32
      %165 = vector.broadcast %cst_68 : f32 to vector<8x128xf32>
      %c0_69 = arith.constant 0 : index
      %c0_70 = arith.constant 0 : index
      %166 = vector.load %arg8[%c0_69, %c0_70] : memref<8x128xf32, #tpu.memory_space<vmem>>, vector<8x128xf32>
      tpu.vector_store %arg8[%c0_69, %c0_70], %165 {strides = array<i32>} : memref<8x128xf32, #tpu.memory_space<vmem>>, vector<8x128xf32>,
    } else {
    }
    %c0 = arith.constant 0 : index
    %c0_1 = arith.constant 0 : index
    %3 = vector.load %arg1[%c0, %c0_1] : memref<24x128xf32, #tpu.memory_space<vmem>>, vector<24x128xf32>
    %c0_2 = arith.constant 0 : index
    %c0_3 = arith.constant 0 : index
    %4 = vector.load %arg2[%c0_2, %c0_3] : memref<128x768xf32, #tpu.memory_space<vmem>>, vector<128x768xf32>
    %cst = arith.constant dense<0.000000e+00> : vector<24x768xf32>
    %5 = tpu.matmul %3, %4, %cst {dimension_numbers = #tpu.dot_dimension_numbers<[1], [0], [0], [1], [0, 0, 1, 1], [], []>} : vector<24x128xf32>, vector<128x768xf32>, vector<24x768xf32> -> vector<24x768xf32>
    %c0_4 = arith.constant 0 : index
    %c0_5 = arith.constant 0 : index
    %6 = vector.load %arg3[%c0_4, %c0_5] : memref<1x768xf32, #tpu.memory_space<vmem>>, vector<1x768xf32>
    %7 = vector.broadcast %6 : vector<1x768xf32> to vector<24x768xf32>
    %8 = arith.addf %5, %7 : vector<24x768xf32>
    %c0_6 = arith.constant 0 : index
    %c0_7 = arith.constant 0 : index
    %9 = vector.load %arg6[%c0_6, %c0_7] : memref<24x768xf32, #tpu.memory_space<vmem>>, vector<24x768xf32>
    tpu.vector_store %arg6[%c0_6, %c0_7], %8 {strides = array<i32>} : memref<24x768xf32, #tpu.memory_space<vmem>>, vector<24x768xf32>,
    %c0_i32_8 = arith.constant 0 : i32
    %c8_i32 = arith.constant 8 : i32
    %10 = arith.muli %c0_i32_8, %c8_i32 : i32
    %11 = tpu.assume_multiple %10, 8 : i32
    %12 = arith.index_cast %11 : i32 to index
    %c0_9 = arith.constant 0 : index
    %13 = vector.load %arg6[%12, %c0_9] : memref<24x768xf32, #tpu.memory_space<vmem>>, vector<8x768xf32>
    %c0_10 = arith.constant 0 : index
    %c0_11 = arith.constant 0 : index
    %14 = vector.load %arg8[%c0_10, %c0_11] : memref<8x128xf32, #tpu.memory_space<vmem>>, vector<8x128xf32>
    %c0_12 = arith.constant 0 : index
    %c0_13 = arith.constant 0 : index
    %15 = vector.load %arg4[%c0_12, %c0_13] : memref<128x640xf32, #tpu.memory_space<vmem>>, vector<128x640xf32>
    %cst_14 = arith.constant dense<0.000000e+00> : vector<8x640xf32>
    %16 = tpu.matmul %14, %15, %cst_14 {dimension_numbers = #tpu.dot_dimension_numbers<[1], [0], [0], [1], [0, 0, 1, 1], [], []>} : vector<8x128xf32>, vector<128x640xf32>, vector<8x640xf32> -> vector<8x640xf32>
    %17 = vector.extract_strided_slice %13 {offsets = [0, 0], sizes = [8, 640], strides = [1, 1]} : vector<8x768xf32> to vector<8x640xf32>
    %18 = arith.addf %17, %16 : vector<8x640xf32>
    %19 = vector.extract_strided_slice %18 {offsets = [0, 0], sizes = [8, 128], strides = [1, 1]} : vector<8x640xf32> to vector<8x128xf32>
    %20 = arith.negf %19 : vector<8x128xf32>
    %21 = math.exp %20 : vector<8x128xf32>
    %cst_15 = arith.constant 1.000000e+00 : f32
    %22 = vector.broadcast %cst_15 : f32 to vector<8x128xf32>
    %23 = arith.addf %22, %21 : vector<8x128xf32>
    %24 = arith.divf %22, %23 : vector<8x128xf32>
    %25 = vector.extract_strided_slice %18 {offsets = [0, 128], sizes = [8, 128], strides = [1, 1]} : vector<8x640xf32> to vector<8x128xf32>
    %26 = arith.negf %25 : vector<8x128xf32>
    %27 = math.exp %26 : vector<8x128xf32>
    %cst_16 = arith.constant 1.000000e+00 : f32
    %28 = vector.broadcast %cst_16 : f32 to vector<8x128xf32>
    %29 = arith.addf %28, %27 : vector<8x128xf32>
    %30 = arith.divf %28, %29 : vector<8x128xf32>
    %31 = vector.extract_strided_slice %18 {offsets = [0, 256], sizes = [8, 128], strides = [1, 1]} : vector<8x640xf32> to vector<8x128xf32>
    %32 = arith.negf %31 : vector<8x128xf32>
    %33 = math.exp %32 : vector<8x128xf32>
    %cst_17 = arith.constant 1.000000e+00 : f32
    %34 = vector.broadcast %cst_17 : f32 to vector<8x128xf32>
    %35 = arith.addf %34, %33 : vector<8x128xf32>
    %36 = arith.divf %34, %35 : vector<8x128xf32>
    %37 = vector.extract_strided_slice %18 {offsets = [0, 384], sizes = [8, 128], strides = [1, 1]} : vector<8x640xf32> to vector<8x128xf32>
    %38 = math.tanh %37 : vector<8x128xf32>
    %39 = vector.extract_strided_slice %18 {offsets = [0, 512], sizes = [8, 128], strides = [1, 1]} : vector<8x640xf32> to vector<8x128xf32>
    %40 = arith.negf %39 : vector<8x128xf32>
    %41 = math.exp %40 : vector<8x128xf32>
    %cst_18 = arith.constant 1.000000e+00 : f32
    %42 = vector.broadcast %cst_18 : f32 to vector<8x128xf32>
    %43 = arith.addf %42, %41 : vector<8x128xf32>
    %44 = arith.divf %42, %43 : vector<8x128xf32>
    %45 = vector.extract_strided_slice %13 {offsets = [0, 640], sizes = [8, 128], strides = [1, 1]} : vector<8x768xf32> to vector<8x128xf32>
    %46 = arith.mulf %24, %38 : vector<8x128xf32>
    %c0_19 = arith.constant 0 : index
    %c0_20 = arith.constant 0 : index
    %47 = vector.load %arg7[%c0_19, %c0_20] : memref<8x128xf32, #tpu.memory_space<vmem>>, vector<8x128xf32>
    %48 = arith.mulf %36, %47 : vector<8x128xf32>
    %49 = arith.addf %46, %48 : vector<8x128xf32>
    %50 = math.tanh %49 : vector<8x128xf32>
    %51 = arith.mulf %30, %50 : vector<8x128xf32>
    %52 = arith.mulf %44, %51 : vector<8x128xf32>
    %cst_21 = arith.constant 1.000000e+00 : f32
    %53 = vector.broadcast %cst_21 : f32 to vector<8x128xf32>
    %54 = arith.subf %53, %44 : vector<8x128xf32>
    %55 = arith.mulf %54, %45 : vector<8x128xf32>
    %56 = arith.addf %52, %55 : vector<8x128xf32>
    %c0_22 = arith.constant 0 : index
    %c0_23 = arith.constant 0 : index
    %57 = vector.load %arg7[%c0_22, %c0_23] : memref<8x128xf32, #tpu.memory_space<vmem>>, vector<8x128xf32>
    tpu.vector_store %arg7[%c0_22, %c0_23], %49 {strides = array<i32>} : memref<8x128xf32, #tpu.memory_space<vmem>>, vector<8x128xf32>,
    %c0_24 = arith.constant 0 : index
    %c0_25 = arith.constant 0 : index
    %58 = vector.load %arg8[%c0_24, %c0_25] : memref<8x128xf32, #tpu.memory_space<vmem>>, vector<8x128xf32>
    tpu.vector_store %arg8[%c0_24, %c0_25], %56 {strides = array<i32>} : memref<8x128xf32, #tpu.memory_space<vmem>>, vector<8x128xf32>,
    %59 = arith.index_cast %11 : i32 to index
    %c0_26 = arith.constant 0 : index
    %60 = vector.load %arg5[%59, %c0_26] : memref<24x128xf32, #tpu.memory_space<vmem>>, vector<8x128xf32>
    tpu.vector_store %arg5[%59, %c0_26], %56 {strides = array<i32>} : memref<24x128xf32, #tpu.memory_space<vmem>>, vector<8x128xf32>,
    %c1_i32 = arith.constant 1 : i32
    %c8_i32_27 = arith.constant 8 : i32
    %61 = arith.muli %c1_i32, %c8_i32_27 : i32
    %62 = tpu.assume_multiple %61, 8 : i32
    %63 = arith.index_cast %62 : i32 to index
    %c0_28 = arith.constant 0 : index
    %64 = vector.load %arg6[%63, %c0_28] : memref<24x768xf32, #tpu.memory_space<vmem>>, vector<8x768xf32>
    %c0_29 = arith.constant 0 : index
    %c0_30 = arith.constant 0 : index
    %65 = vector.load %arg8[%c0_29, %c0_30] : memref<8x128xf32, #tpu.memory_space<vmem>>, vector<8x128xf32>
    %c0_31 = arith.constant 0 : index
    %c0_32 = arith.constant 0 : index
    %66 = vector.load %arg4[%c0_31, %c0_32] : memref<128x640xf32, #tpu.memory_space<vmem>>, vector<128x640xf32>
    %cst_33 = arith.constant dense<0.000000e+00> : vector<8x640xf32>
    %67 = tpu.matmul %65, %66, %cst_33 {dimension_numbers = #tpu.dot_dimension_numbers<[1], [0], [0], [1], [0, 0, 1, 1], [], []>} : vector<8x128xf32>, vector<128x640xf32>, vector<8x640xf32> -> vector<8x640xf32>
    %68 = vector.extract_strided_slice %64 {offsets = [0, 0], sizes = [8, 640], strides = [1, 1]} : vector<8x768xf32> to vector<8x640xf32>
    %69 = arith.addf %68, %67 : vector<8x640xf32>
    %70 = vector.extract_strided_slice %69 {offsets = [0, 0], sizes = [8, 128], strides = [1, 1]} : vector<8x640xf32> to vector<8x128xf32>
    %71 = arith.negf %70 : vector<8x128xf32>
    %72 = math.exp %71 : vector<8x128xf32>
    %cst_34 = arith.constant 1.000000e+00 : f32
    %73 = vector.broadcast %cst_34 : f32 to vector<8x128xf32>
    %74 = arith.addf %73, %72 : vector<8x128xf32>
    %75 = arith.divf %73, %74 : vector<8x128xf32>
    %76 = vector.extract_strided_slice %69 {offsets = [0, 128], sizes = [8, 128], strides = [1, 1]} : vector<8x640xf32> to vector<8x128xf32>
    %77 = arith.negf %76 : vector<8x128xf32>
    %78 = math.exp %77 : vector<8x128xf32>
    %cst_35 = arith.constant 1.000000e+00 : f32
    %79 = vector.broadcast %cst_35 : f32 to vector<8x128xf32>
    %80 = arith.addf %79, %78 : vector<8x128xf32>
    %81 = arith.divf %79, %80 : vector<8x128xf32>
    %82 = vector.extract_strided_slice %69 {offsets = [0, 256], sizes = [8, 128], strides = [1, 1]} : vector<8x640xf32> to vector<8x128xf32>
    %83 = arith.negf %82 : vector<8x128xf32>
    %84 = math.exp %83 : vector<8x128xf32>
    %cst_36 = arith.constant 1.000000e+00 : f32
    %85 = vector.broadcast %cst_36 : f32 to vector<8x128xf32>
    %86 = arith.addf %85, %84 : vector<8x128xf32>
    %87 = arith.divf %85, %86 : vector<8x128xf32>
    %88 = vector.extract_strided_slice %69 {offsets = [0, 384], sizes = [8, 128], strides = [1, 1]} : vector<8x640xf32> to vector<8x128xf32>
    %89 = math.tanh %88 : vector<8x128xf32>
    %90 = vector.extract_strided_slice %69 {offsets = [0, 512], sizes = [8, 128], strides = [1, 1]} : vector<8x640xf32> to vector<8x128xf32>
    %91 = arith.negf %90 : vector<8x128xf32>
    %92 = math.exp %91 : vector<8x128xf32>
    %cst_37 = arith.constant 1.000000e+00 : f32
    %93 = vector.broadcast %cst_37 : f32 to vector<8x128xf32>
    %94 = arith.addf %93, %92 : vector<8x128xf32>
    %95 = arith.divf %93, %94 : vector<8x128xf32>
    %96 = vector.extract_strided_slice %64 {offsets = [0, 640], sizes = [8, 128], strides = [1, 1]} : vector<8x768xf32> to vector<8x128xf32>
    %97 = arith.mulf %75, %89 : vector<8x128xf32>
    %c0_38 = arith.constant 0 : index
    %c0_39 = arith.constant 0 : index
    %98 = vector.load %arg7[%c0_38, %c0_39] : memref<8x128xf32, #tpu.memory_space<vmem>>, vector<8x128xf32>
    %99 = arith.mulf %87, %98 : vector<8x128xf32>
    %100 = arith.addf %97, %99 : vector<8x128xf32>
    %101 = math.tanh %100 : vector<8x128xf32>
    %102 = arith.mulf %81, %101 : vector<8x128xf32>
    %103 = arith.mulf %95, %102 : vector<8x128xf32>
    %cst_40 = arith.constant 1.000000e+00 : f32
    %104 = vector.broadcast %cst_40 : f32 to vector<8x128xf32>
    %105 = arith.subf %104, %95 : vector<8x128xf32>
    %106 = arith.mulf %105, %96 : vector<8x128xf32>
    %107 = arith.addf %103, %106 : vector<8x128xf32>
    %c0_41 = arith.constant 0 : index
    %c0_42 = arith.constant 0 : index
    %108 = vector.load %arg7[%c0_41, %c0_42] : memref<8x128xf32, #tpu.memory_space<vmem>>, vector<8x128xf32>
    tpu.vector_store %arg7[%c0_41, %c0_42], %100 {strides = array<i32>} : memref<8x128xf32, #tpu.memory_space<vmem>>, vector<8x128xf32>,
    %c0_43 = arith.constant 0 : index
    %c0_44 = arith.constant 0 : index
    %109 = vector.load %arg8[%c0_43, %c0_44] : memref<8x128xf32, #tpu.memory_space<vmem>>, vector<8x128xf32>
    tpu.vector_store %arg8[%c0_43, %c0_44], %107 {strides = array<i32>} : memref<8x128xf32, #tpu.memory_space<vmem>>, vector<8x128xf32>,
    %110 = arith.index_cast %62 : i32 to index
    %c0_45 = arith.constant 0 : index
    %111 = vector.load %arg5[%110, %c0_45] : memref<24x128xf32, #tpu.memory_space<vmem>>, vector<8x128xf32>
    tpu.vector_store %arg5[%110, %c0_45], %107 {strides = array<i32>} : memref<24x128xf32, #tpu.memory_space<vmem>>, vector<8x128xf32>,
    %c2_i32 = arith.constant 2 : i32
    %c8_i32_46 = arith.constant 8 : i32
    %112 = arith.muli %c2_i32, %c8_i32_46 : i32
    %113 = tpu.assume_multiple %112, 8 : i32
    %114 = arith.index_cast %113 : i32 to index
    %c0_47 = arith.constant 0 : index
    %115 = vector.load %arg6[%114, %c0_47] : memref<24x768xf32, #tpu.memory_space<vmem>>, vector<8x768xf32>
    %c0_48 = arith.constant 0 : index
    %c0_49 = arith.constant 0 : index
    %116 = vector.load %arg8[%c0_48, %c0_49] : memref<8x128xf32, #tpu.memory_space<vmem>>, vector<8x128xf32>
    %c0_50 = arith.constant 0 : index
    %c0_51 = arith.constant 0 : index
    %117 = vector.load %arg4[%c0_50, %c0_51] : memref<128x640xf32, #tpu.memory_space<vmem>>, vector<128x640xf32>
    %cst_52 = arith.constant dense<0.000000e+00> : vector<8x640xf32>
    %118 = tpu.matmul %116, %117, %cst_52 {dimension_numbers = #tpu.dot_dimension_numbers<[1], [0], [0], [1], [0, 0, 1, 1], [], []>} : vector<8x128xf32>, vector<128x640xf32>, vector<8x640xf32> -> vector<8x640xf32>
    %119 = vector.extract_strided_slice %115 {offsets = [0, 0], sizes = [8, 640], strides = [1, 1]} : vector<8x768xf32> to vector<8x640xf32>
    %120 = arith.addf %119, %118 : vector<8x640xf32>
    %121 = vector.extract_strided_slice %120 {offsets = [0, 0], sizes = [8, 128], strides = [1, 1]} : vector<8x640xf32> to vector<8x128xf32>
    %122 = arith.negf %121 : vector<8x128xf32>
    %123 = math.exp %122 : vector<8x128xf32>
    %cst_53 = arith.constant 1.000000e+00 : f32
    %124 = vector.broadcast %cst_53 : f32 to vector<8x128xf32>
    %125 = arith.addf %124, %123 : vector<8x128xf32>
    %126 = arith.divf %124, %125 : vector<8x128xf32>
    %127 = vector.extract_strided_slice %120 {offsets = [0, 128], sizes = [8, 128], strides = [1, 1]} : vector<8x640xf32> to vector<8x128xf32>
    %128 = arith.negf %127 : vector<8x128xf32>
    %129 = math.exp %128 : vector<8x128xf32>
    %cst_54 = arith.constant 1.000000e+00 : f32
    %130 = vector.broadcast %cst_54 : f32 to vector<8x128xf32>
    %131 = arith.addf %130, %129 : vector<8x128xf32>
    %132 = arith.divf %130, %131 : vector<8x128xf32>
    %133 = vector.extract_strided_slice %120 {offsets = [0, 256], sizes = [8, 128], strides = [1, 1]} : vector<8x640xf32> to vector<8x128xf32>
    %134 = arith.negf %133 : vector<8x128xf32>
    %135 = math.exp %134 : vector<8x128xf32>
    %cst_55 = arith.constant 1.000000e+00 : f32
    %136 = vector.broadcast %cst_55 : f32 to vector<8x128xf32>
    %137 = arith.addf %136, %135 : vector<8x128xf32>
    %138 = arith.divf %136, %137 : vector<8x128xf32>
    %139 = vector.extract_strided_slice %120 {offsets = [0, 384], sizes = [8, 128], strides = [1, 1]} : vector<8x640xf32> to vector<8x128xf32>
    %140 = math.tanh %139 : vector<8x128xf32>
    %141 = vector.extract_strided_slice %120 {offsets = [0, 512], sizes = [8, 128], strides = [1, 1]} : vector<8x640xf32> to vector<8x128xf32>
    %142 = arith.negf %141 : vector<8x128xf32>
    %143 = math.exp %142 : vector<8x128xf32>
    %cst_56 = arith.constant 1.000000e+00 : f32
    %144 = vector.broadcast %cst_56 : f32 to vector<8x128xf32>
    %145 = arith.addf %144, %143 : vector<8x128xf32>
    %146 = arith.divf %144, %145 : vector<8x128xf32>
    %147 = vector.extract_strided_slice %115 {offsets = [0, 640], sizes = [8, 128], strides = [1, 1]} : vector<8x768xf32> to vector<8x128xf32>
    %148 = arith.mulf %126, %140 : vector<8x128xf32>
    %c0_57 = arith.constant 0 : index
    %c0_58 = arith.constant 0 : index
    %149 = vector.load %arg7[%c0_57, %c0_58] : memref<8x128xf32, #tpu.memory_space<vmem>>, vector<8x128xf32>
    %150 = arith.mulf %138, %149 : vector<8x128xf32>
    %151 = arith.addf %148, %150 : vector<8x128xf32>
    %152 = math.tanh %151 : vector<8x128xf32>
    %153 = arith.mulf %132, %152 : vector<8x128xf32>
    %154 = arith.mulf %146, %153 : vector<8x128xf32>
    %cst_59 = arith.constant 1.000000e+00 : f32
    %155 = vector.broadcast %cst_59 : f32 to vector<8x128xf32>
    %156 = arith.subf %155, %146 : vector<8x128xf32>
    %157 = arith.mulf %156, %147 : vector<8x128xf32>
    %158 = arith.addf %154, %157 : vector<8x128xf32>
    %c0_60 = arith.constant 0 : index
    %c0_61 = arith.constant 0 : index
    %159 = vector.load %arg7[%c0_60, %c0_61] : memref<8x128xf32, #tpu.memory_space<vmem>>, vector<8x128xf32>
    tpu.vector_store %arg7[%c0_60, %c0_61], %151 {strides = array<i32>} : memref<8x128xf32, #tpu.memory_space<vmem>>, vector<8x128xf32>,
    %c0_62 = arith.constant 0 : index
    %c0_63 = arith.constant 0 : index
    %160 = vector.load %arg8[%c0_62, %c0_63] : memref<8x128xf32, #tpu.memory_space<vmem>>, vector<8x128xf32>
    tpu.vector_store %arg8[%c0_62, %c0_63], %158 {strides = array<i32>} : memref<8x128xf32, #tpu.memory_space<vmem>>, vector<8x128xf32>,
    %161 = arith.index_cast %113 : i32 to index
    %c0_64 = arith.constant 0 : index
    %162 = vector.load %arg5[%161, %c0_64] : memref<24x128xf32, #tpu.memory_space<vmem>>, vector<8x128xf32>
    tpu.vector_store %arg5[%161, %c0_64], %158 {strides = array<i32>} : memref<24x128xf32, #tpu.memory_space<vmem>>, vector<8x128xf32>,
    %c3_i32 = arith.constant 3 : i32
    return
  }
  func.func @transform_0(%arg0: i32) -> (i32, i32) {
    %c0_i32 = arith.constant 0 : i32
    %c0_i32_0 = arith.constant 0 : i32
    return %arg0, %c0_i32 : i32, i32
  }
  func.func @transform_1(%arg0: i32) -> (i32, i32) {
    %c0_i32 = arith.constant 0 : i32
    %c0_i32_0 = arith.constant 0 : i32
    %c0_i32_1 = arith.constant 0 : i32
    return %c0_i32, %c0_i32_0 : i32, i32
  }
  func.func @transform_2(%arg0: i32) -> (i32, i32) {
    %c0_i32 = arith.constant 0 : i32
    %c0_i32_0 = arith.constant 0 : i32
    %c0_i32_1 = arith.constant 0 : i32
    return %c0_i32, %c0_i32_0 : i32, i32
  }
  func.func @transform_3(%arg0: i32) -> (i32, i32) {
    %c0_i32 = arith.constant 0 : i32
    %c0_i32_0 = arith.constant 0 : i32
    %c0_i32_1 = arith.constant 0 : i32
    return %c0_i32, %c0_i32_0 : i32, i32
  }
  func.func @transform_4(%arg0: i32) -> (i32, i32) {
    %c0_i32 = arith.constant 0 : i32
    %c0_i32_0 = arith.constant 0 : i32
    return %arg0, %c0_i32 : i32, i32
  }
}

</mosaic_0001>

<llo_original>
// kernel: tpu_custom_call.1
$region0: #{tpu_custom_call.1}
  #allocation0 [shape = 'u32[]', space=smem, size = 0x4, offset = 0x4, fixed_abs, tag = 'smem constant byte address 0x4 - core index']
  #allocation1 [shape = 'u32[144,128]{1,0:T(1,128)}', space=vmem, size = 0x12000, scoped, tag = 'internal scratch']
  #allocation2 [shape = 'f32[24,768]{1,0:T(8,128)}', space=vmem, size = 0x12000, scoped, tag = 'scratch operand']
  #allocation3 [shape = 'f32[8,128]{1,0:T(8,128)}', space=vmem, size = 0x1000, scoped, tag = 'scratch operand']
  #allocation4 [shape = 'f32[8,128]{1,0:T(8,128)}', space=vmem, size = 0x1000, scoped, tag = 'scratch operand']
  %s0 = inlined_call_operand.hbm [shape: f32[24,128], index: 0, kind: input, shape index: {}]
  %s1 = inlined_call_operand.hbm [shape: f32[128,768], index: 1, kind: input, shape index: {}]
  %s2 = inlined_call_operand.vmem [shape: f32[1,768], index: 2, kind: input, shape index: {}]
  %s3 = inlined_call_operand.hbm [shape: f32[128,640], index: 3, kind: input, shape index: {}]
  %s4 = inlined_call_operand.hbm [shape: f32[24,128], index: 4, kind: output, shape index: {}]
  %s5 = sld [smem:[#allocation0]]
  $region42: #{tpu_custom_call.1} parent=0
    _
  %s7 = ssub.s32 1, %s5
  %s8 = scalar_select 0, %s7, %s5
  $region1: #{tpu_custom_call.1} parent=0
    #allocation5 [shape = 'u8[12288]{0}', space=vmem, size = 0x3000, scoped, tag = 'input window, operand 0, single buffered']
    #allocation6 [shape = 's32[1]{0}', space=sflag, size = 0x4, scoped, tag = 'scoped memory for tpu_custom_call.1']
    #allocation7 [shape = 's32[1]{0}', space=sflag, size = 0x4, scoped, tag = 'scoped memory for tpu_custom_call.1']
    #allocation8 [shape = 'u8[393216]{0}', space=vmem, size = 0x60000, scoped, tag = 'input window, operand 1, single buffered']
    #allocation9 [shape = 's32[1]{0}', space=sflag, size = 0x4, scoped, tag = 'scoped memory for tpu_custom_call.1']
    #allocation10 [shape = 'u8[327680]{0}', space=vmem, size = 0x50000, scoped, tag = 'input window, operand 3, single buffered']
    #allocation11 [shape = 'u8[12288]{0}', space=vmem, size = 0x3000, scoped, tag = 'output window, operand 0, single buffered']
    %9 = vsyncpa [#allocation6], 0
    %10 = vsyncpa [#allocation9], 0
    %11 = vsyncpa [#allocation7], 0
    // Predicated region
    $region2: #{tpu_custom_call.1} parent=1 // pred_check
      _
    $region3: #{tpu_custom_call.1} parent=1 // pred_check_branch
      %13 = sbr.rel (0) target = $region5
    $region4: #{tpu_custom_call.1} parent=1 // pred_region
      %s15 = ssub.s32 384, 384
      %16 = vsyncadd [#allocation6], %s15
      %s17 = sshll.u32 [#allocation5], 4
      %s18 = int_to_ptr.vmem [resolvable:$true] %s17
      %23 = dma.hbm_to_vmem [thread:$0]  %s0, 384, %s18, [#allocation6], 128, 128, 8
    $region5: #{tpu_custom_call.1} parent=1 // pred_fallthru
      _
    // Predicated region
    $region6: #{tpu_custom_call.1} parent=1 // pred_check
      _
    $region7: #{tpu_custom_call.1} parent=1 // pred_check_branch
      %25 = sbr.rel (0) target = $region9
    $region8: #{tpu_custom_call.1} parent=1 // pred_region
      %s27 = ssub.s32 12288, 12288
      %28 = vsyncadd [#allocation9], %s27
      %s29 = sshll.u32 [#allocation8], 4
      %s30 = int_to_ptr.vmem [resolvable:$true] %s29
      %35 = dma.hbm_to_vmem [thread:$0]  %s1, 12288, %s30, [#allocation9], 768, 768, 48
    $region9: #{tpu_custom_call.1} parent=1 // pred_fallthru
      _
    // Predicated region
    $region10: #{tpu_custom_call.1} parent=1 // pred_check
      _
    $region11: #{tpu_custom_call.1} parent=1 // pred_check_branch
      %37 = sbr.rel (0) target = $region13
    $region12: #{tpu_custom_call.1} parent=1 // pred_region
      _
    $region13: #{tpu_custom_call.1} parent=1 // pred_fallthru
      _
    // Predicated region
    $region14: #{tpu_custom_call.1} parent=1 // pred_check
      _
    $region15: #{tpu_custom_call.1} parent=1 // pred_check_branch
      %39 = sbr.rel (0) target = $region17
    $region16: #{tpu_custom_call.1} parent=1 // pred_region
      %s41 = ssub.s32 10240, 10240
      %42 = vsyncadd [#allocation9], %s41
      %s43 = sshll.u32 [#allocation10], 4
      %s44 = int_to_ptr.vmem [resolvable:$true] %s43
      %49 = dma.hbm_to_vmem [thread:$0]  %s3, 10240, %s44, [#allocation9], 640, 640, 40
    $region17: #{tpu_custom_call.1} parent=1 // pred_fallthru
      _
    // Predicated region
    $region18: #{tpu_custom_call.1} parent=1 // pred_check
      _
    $region19: #{tpu_custom_call.1} parent=1 // pred_check_branch
      %51 = sbr.rel (0) target = $region21
    $region20: #{tpu_custom_call.1} parent=1 // pred_region
      %52 = dma.done [#allocation6], 384
    $region21: #{tpu_custom_call.1} parent=1 // pred_fallthru
      _
    // Predicated region
    $region22: #{tpu_custom_call.1} parent=1 // pred_check
      _
    $region23: #{tpu_custom_call.1} parent=1 // pred_check_branch
      %54 = sbr.rel (0) target = $region25
    $region24: #{tpu_custom_call.1} parent=1 // pred_region
      %55 = dma.done [#allocation9], 12288
    $region25: #{tpu_custom_call.1} parent=1 // pred_fallthru
      _
    // Predicated region
    $region26: #{tpu_custom_call.1} parent=1 // pred_check
      _
    $region27: #{tpu_custom_call.1} parent=1 // pred_check_branch
      %57 = sbr.rel (0) target = $region29
    $region28: #{tpu_custom_call.1} parent=1 // pred_region
      %58 = dma.done [#allocation9], 10240
    $region29: #{tpu_custom_call.1} parent=1 // pred_fallthru
      _
    %p59 = scmp.eq.s32.totalorder 0, 0
    // Predicated region
    $region30: #{tpu_custom_call.1} parent=1 // pred_check
      %p60 = pneg %p59
    $region31: #{tpu_custom_call.1} parent=1 // pred_check_branch
      %62 = sbr.rel (%p60) target = $region33
    $region32: #{tpu_custom_call.1} parent=1 // pred_region
      %63 = vst [vmem:[#allocation3] sm:$0xff] 0.0
      %64 = vst [vmem:[#allocation4] sm:$0xff] 0.0
    $region33: #{tpu_custom_call.1} parent=1 // pred_fallthru
      _
    %v65 = vld [vmem:[#allocation5] sm:$0xff]
    %v66 = vld [vmem:[#allocation5 + $0x8] sm:$0xff]
    %v67 = vld [vmem:[#allocation5 + $0x10] sm:$0xff]
    %v68 = vld [vmem:[#allocation8] sm:$0xff]
    %v69 = vld [vmem:[#allocation8 + $0x8] sm:$0xff]
    %v70 = vld [vmem:[#allocation8 + $0x10] sm:$0xff]
    %v71 = vld [vmem:[#allocation8 + $0x18] sm:$0xff]
    %v72 = vld [vmem:[#allocation8 + $0x20] sm:$0xff]
    %v73 = vld [vmem:[#allocation8 + $0x28] sm:$0xff]
    %v74 = vld [vmem:[#allocation8 + $0x30] sm:$0xff]
    %v75 = vld [vmem:[#allocation8 + $0x38] sm:$0xff]
    %v76 = vld [vmem:[#allocation8 + $0x40] sm:$0xff]
    %v77 = vld [vmem:[#allocation8 + $0x48] sm:$0xff]
    %v78 = vld [vmem:[#allocation8 + $0x50] sm:$0xff]
    %v79 = vld [vmem:[#allocation8 + $0x58] sm:$0xff]
    %v80 = vld [vmem:[#allocation8 + $0x60] sm:$0xff]
    %v81 = vld [vmem:[#allocation8 + $0x68] sm:$0xff]
    %v82 = vld [vmem:[#allocation8 + $0x70] sm:$0xff]
    %v83 = vld [vmem:[#allocation8 + $0x78] sm:$0xff]
    %v84 = vld [vmem:[#allocation8 + $0x80] sm:$0xff]
    %v85 = vld [vmem:[#allocation8 + $0x88] sm:$0xff]
    %v86 = vld [vmem:[#allocation8 + $0x90] sm:$0xff]
    %v87 = vld [vmem:[#allocation8 + $0x98] sm:$0xff]
    %v88 = vld [vmem:[#allocation8 + $0xa0] sm:$0xff]
    %v89 = vld [vmem:[#allocation8 + $0xa8] sm:$0xff]
    %v90 = vld [vmem:[#allocation8 + $0xb0] sm:$0xff]
    %v91 = vld [vmem:[#allocation8 + $0xb8] sm:$0xff]
    %v92 = vld [vmem:[#allocation8 + $0xc0] sm:$0xff]
    %v93 = vld [vmem:[#allocation8 + $0xc8] sm:$0xff]
    %v94 = vld [vmem:[#allocation8 + $0xd0] sm:$0xff]
    %v95 = vld [vmem:[#allocation8 + $0xd8] sm:$0xff]
    %v96 = vld [vmem:[#allocation8 + $0xe0] sm:$0xff]
    %v97 = vld [vmem:[#allocation8 + $0xe8] sm:$0xff]
    %v98 = vld [vmem:[#allocation8 + $0xf0] sm:$0xff]
    %v99 = vld [vmem:[#allocation8 + $0xf8] sm:$0xff]
    %v100 = vld [vmem:[#allocation8 + $0x100] sm:$0xff]
    %v101 = vld [vmem:[#allocation8 + $0x108] sm:$0xff]
    %v102 = vld [vmem:[#allocation8 + $0x110] sm:$0xff]
    %v103 = vld [vmem:[#allocation8 + $0x118] sm:$0xff]
    %v104 = vld [vmem:[#allocation8 + $0x120] sm:$0xff]
    %v105 = vld [vmem:[#allocation8 + $0x128] sm:$0xff]
    %v106 = vld [vmem:[#allocation8 + $0x130] sm:$0xff]
    %v107 = vld [vmem:[#allocation8 + $0x138] sm:$0xff]
    %v108 = vld [vmem:[#allocation8 + $0x140] sm:$0xff]
    %v109 = vld [vmem:[#allocation8 + $0x148] sm:$0xff]
    %v110 = vld [vmem:[#allocation8 + $0x150] sm:$0xff]
    %v111 = vld [vmem:[#allocation8 + $0x158] sm:$0xff]
    %v112 = vld [vmem:[#allocation8 + $0x160] sm:$0xff]
    %v113 = vld [vmem:[#allocation8 + $0x168] sm:$0xff]
    %v114 = vld [vmem:[#allocation8 + $0x170] sm:$0xff]
    %v115 = vld [vmem:[#allocation8 + $0x178] sm:$0xff]
    %v116 = vld [vmem:[#allocation8 + $0x180] sm:$0xff]
    %v117 = vld [vmem:[#allocation8 + $0x188] sm:$0xff]
    %v118 = vld [vmem:[#allocation8 + $0x190] sm:$0xff]
    %v119 = vld [vmem:[#allocation8 + $0x198] sm:$0xff]
    %v120 = vld [vmem:[#allocation8 + $0x1a0] sm:$0xff]
    %v121 = vld [vmem:[#allocation8 + $0x1a8] sm:$0xff]
    %v122 = vld [vmem:[#allocation8 + $0x1b0] sm:$0xff]
    %v123 = vld [vmem:[#allocation8 + $0x1b8] sm:$0xff]
    %v124 = vld [vmem:[#allocation8 + $0x1c0] sm:$0xff]
    %v125 = vld [vmem:[#allocation8 + $0x1c8] sm:$0xff]
    %v126 = vld [vmem:[#allocation8 + $0x1d0] sm:$0xff]
    %v127 = vld [vmem:[#allocation8 + $0x1d8] sm:$0xff]
    %v128 = vld [vmem:[#allocation8 + $0x1e0] sm:$0xff]
    %v129 = vld [vmem:[#allocation8 + $0x1e8] sm:$0xff]
    %v130 = vld [vmem:[#allocation8 + $0x1f0] sm:$0xff]
    %v131 = vld [vmem:[#allocation8 + $0x1f8] sm:$0xff]
    %v132 = vld [vmem:[#allocation8 + $0x200] sm:$0xff]
    %v133 = vld [vmem:[#allocation8 + $0x208] sm:$0xff]
    %v134 = vld [vmem:[#allocation8 + $0x210] sm:$0xff]
    %v135 = vld [vmem:[#allocation8 + $0x218] sm:$0xff]
    %v136 = vld [vmem:[#allocation8 + $0x220] sm:$0xff]
    %v137 = vld [vmem:[#allocation8 + $0x228] sm:$0xff]
    %v138 = vld [vmem:[#allocation8 + $0x230] sm:$0xff]
    %v139 = vld [vmem:[#allocation8 + $0x238] sm:$0xff]
    %v140 = vld [vmem:[#allocation8 + $0x240] sm:$0xff]
    %v141 = vld [vmem:[#allocation8 + $0x248] sm:$0xff]
    %v142 = vld [vmem:[#allocation8 + $0x250] sm:$0xff]
    %v143 = vld [vmem:[#allocation8 + $0x258] sm:$0xff]
    %v144 = vld [vmem:[#allocation8 + $0x260] sm:$0xff]
    %v145 = vld [vmem:[#allocation8 + $0x268] sm:$0xff]
    %v146 = vld [vmem:[#allocation8 + $0x270] sm:$0xff]
    %v147 = vld [vmem:[#allocation8 + $0x278] sm:$0xff]
    %v148 = vld [vmem:[#allocation8 + $0x280] sm:$0xff]
    %v149 = vld [vmem:[#allocation8 + $0x288] sm:$0xff]
    %v150 = vld [vmem:[#allocation8 + $0x290] sm:$0xff]
    %v151 = vld [vmem:[#allocation8 + $0x298] sm:$0xff]
    %v152 = vld [vmem:[#allocation8 + $0x2a0] sm:$0xff]
    %v153 = vld [vmem:[#allocation8 + $0x2a8] sm:$0xff]
    %v154 = vld [vmem:[#allocation8 + $0x2b0] sm:$0xff]
    %v155 = vld [vmem:[#allocation8 + $0x2b8] sm:$0xff]
    %v156 = vld [vmem:[#allocation8 + $0x2c0] sm:$0xff]
    %v157 = vld [vmem:[#allocation8 + $0x2c8] sm:$0xff]
    %v158 = vld [vmem:[#allocation8 + $0x2d0] sm:$0xff]
    %v159 = vld [vmem:[#allocation8 + $0x2d8] sm:$0xff]
    %v160 = vld [vmem:[#allocation8 + $0x2e0] sm:$0xff]
    %v161 = vld [vmem:[#allocation8 + $0x2e8] sm:$0xff]
    %v162 = vld [vmem:[#allocation8 + $0x2f0] sm:$0xff]
    %v163 = vld [vmem:[#allocation8 + $0x2f8] sm:$0xff]
    %v164 = vld [vmem:[%s2] sm:$0x3f]
    %v166 = vlaneseq
    %v167 = vshrl.u32 %v166, 7
    %v168 = vsub.s32 0, %v167
    %v169 = vrot.slane %v164, %v168
    %v170 = vlaneseq
    %v171 = vshrl.u32 %v170, 7
    %v172 = vsub.s32 1, %v171
    %v173 = vrot.slane %v164, %v172
    %v174 = vlaneseq
    %v175 = vshrl.u32 %v174, 7
    %v176 = vsub.s32 2, %v175
    %v177 = vrot.slane %v164, %v176
    %v178 = vlaneseq
    %v179 = vshrl.u32 %v178, 7
    %v180 = vsub.s32 3, %v179
    %v181 = vrot.slane %v164, %v180
    %v182 = vlaneseq
    %v183 = vshrl.u32 %v182, 7
    %v184 = vsub.s32 4, %v183
    %v185 = vrot.slane %v164, %v184
    %v186 = vlaneseq
    %v187 = vshrl.u32 %v186, 7
    %v188 = vsub.s32 5, %v187
    %v189 = vrot.slane %v164, %v188
    %196 = vmatprep.subr.mxu0 %v69
    %197 = vmatpush1.msra.mxu0 %v68
    %198 = vmatprep.subr.mxu0 %v75
    %199 = vmatpush1.msra.mxu0 %v74
    %200 = vmatprep.subr.mxu0 %v81
    %201 = vmatpush1.msra.mxu0 %v80
    %202 = vmatprep.subr.mxu0 %v87
    %203 = vmatpush1.msra.mxu0 %v86
    %204 = vmatprep.subr.mxu0 %v93
    %205 = vmatpush1.msra.mxu0 %v92
    %206 = vmatprep.subr.mxu0 %v99
    %207 = vmatpush1.msra.mxu0 %v98
    %208 = vmatprep.subr.mxu0 %v105
    %209 = vmatpush1.msra.mxu0 %v104
    %210 = vmatprep.subr.mxu0 %v111
    %211 = vmatpush1.msra.mxu0 %v110
    %212 = vmatprep.subr.mxu0 %v117
    %213 = vmatpush1.msra.mxu0 %v116
    %214 = vmatprep.subr.mxu0 %v123
    %215 = vmatpush1.msra.mxu0 %v122
    %216 = vmatprep.subr.mxu0 %v129
    %217 = vmatpush1.msra.mxu0 %v128
    %218 = vmatprep.subr.mxu0 %v135
    %219 = vmatpush1.msra.mxu0 %v134
    %220 = vmatprep.subr.mxu0 %v141
    %221 = vmatpush1.msra.mxu0 %v140
    %222 = vmatprep.subr.mxu0 %v147
    %223 = vmatpush1.msra.mxu0 %v146
    %224 = vmatprep.subr.mxu0 %v153
    %225 = vmatpush1.msra.mxu0 %v152
    %226 = vmatprep.subr.mxu0 %v159
    %227 = vmatpush1.msra.mxu0 %v158
    %228 = vmatprep.subr.mxu0 0.0
    %229 = vmatpush1.msra.mxu0 0.0
    %230 = vmatprep.subr.mxu0 0.0
    %231 = vmatpush1.msra.mxu0 0.0
    %232 = vmatprep.subr.mxu0 0.0
    %233 = vmatpush1.msra.mxu0 0.0
    %234 = vmatprep.subr.mxu0 0.0
    %235 = vmatpush1.msra.mxu0 0.0
    %236 = vmatprep.subr.mxu0 0.0
    %237 = vmatpush1.msra.mxu0 0.0
    %238 = vmatprep.subr.mxu0 0.0
    %239 = vmatpush1.msra.mxu0 0.0
    %240 = vmatprep.subr.mxu0 0.0
    %241 = vmatpush1.msra.mxu0 0.0
    %242 = vmatprep.subr.mxu0 0.0
    %243 = vmatpush1.msra.mxu0 0.0
    %244 = vmatprep.subr.mxu0 0.0
    %245 = vmatpush1.msra.mxu0 0.0
    %246 = vmatprep.subr.mxu0 0.0
    %247 = vmatpush1.msra.mxu0 0.0
    %248 = vmatprep.subr.mxu0 0.0
    %249 = vmatpush1.msra.mxu0 0.0
    %250 = vmatprep.subr.mxu0 0.0
    %251 = vmatpush1.msra.mxu0 0.0
    %252 = vmatprep.subr.mxu0 0.0
    %253 = vmatpush1.msra.mxu0 0.0
    %254 = vmatprep.subr.mxu0 0.0
    %255 = vmatpush1.msra.mxu0 0.0
    %256 = vmatprep.subr.mxu0 0.0
    %257 = vmatpush1.msra.mxu0 0.0
    %258 = vmatprep.subr.mxu0 0.0
    %259 = vmatpush1.msra.mxu0 0.0
    %260 = vmatprep.mubr.f32.mxu0 0.0
    %261 = vmatmul.mubr.f32.gmra.mrb[0].mxu0 %v65
    %v262 = vpop.f32.mrb[0].mxu0
    %v263 = vadd.f32 %v169, %v262
    %v264 = vpop.f32.mrb[0].mxu0
    %v265 = vadd.f32 %v173, %v264
    %266 = vmatprep.mubr.f32.mxu0 0.0
    %267 = vmatmul.mubr.f32.gmra.mrb[0].mxu0 %v66
    %v268 = vpop.f32.mrb[0].mxu0
    %v269 = vadd.f32 %v169, %v268
    %v270 = vpop.f32.mrb[0].mxu0
    %v271 = vadd.f32 %v173, %v270
    %272 = vmatprep.mubr.f32.mxu0 0.0
    %273 = vmatmul.mubr.f32.gmra.mrb[0].mxu0 %v67
    %v274 = vpop.f32.mrb[0].mxu0
    %v275 = vadd.f32 %v169, %v274
    %v276 = vpop.f32.mrb[0].mxu0
    %v277 = vadd.f32 %v173, %v276
    %278 = vdwg.mxu0
    %279 = vmatprep.subr.mxu0 %v71
    %280 = vmatpush1.msra.mxu0 %v70
    %281 = vmatprep.subr.mxu0 %v77
    %282 = vmatpush1.msra.mxu0 %v76
    %283 = vmatprep.subr.mxu0 %v83
    %284 = vmatpush1.msra.mxu0 %v82
    %285 = vmatprep.subr.mxu0 %v89
    %286 = vmatpush1.msra.mxu0 %v88
    %287 = vmatprep.subr.mxu0 %v95
    %288 = vmatpush1.msra.mxu0 %v94
    %289 = vmatprep.subr.mxu0 %v101
    %290 = vmatpush1.msra.mxu0 %v100
    %291 = vmatprep.subr.mxu0 %v107
    %292 = vmatpush1.msra.mxu0 %v106
    %293 = vmatprep.subr.mxu0 %v113
    %294 = vmatpush1.msra.mxu0 %v112
    %295 = vmatprep.subr.mxu0 %v119
    %296 = vmatpush1.msra.mxu0 %v118
    %297 = vmatprep.subr.mxu0 %v125
    %298 = vmatpush1.msra.mxu0 %v124
    %299 = vmatprep.subr.mxu0 %v131
    %300 = vmatpush1.msra.mxu0 %v130
    %301 = vmatprep.subr.mxu0 %v137
    %302 = vmatpush1.msra.mxu0 %v136
    %303 = vmatprep.subr.mxu0 %v143
    %304 = vmatpush1.msra.mxu0 %v142
    %305 = vmatprep.subr.mxu0 %v149
    %306 = vmatpush1.msra.mxu0 %v148
    %307 = vmatprep.subr.mxu0 %v155
    %308 = vmatpush1.msra.mxu0 %v154
    %309 = vmatprep.subr.mxu0 %v161
    %310 = vmatpush1.msra.mxu0 %v160
    %311 = vmatprep.subr.mxu0 0.0
    %312 = vmatpush1.msra.mxu0 0.0
    %313 = vmatprep.subr.mxu0 0.0
    %314 = vmatpush1.msra.mxu0 0.0
    %315 = vmatprep.subr.mxu0 0.0
    %316 = vmatpush1.msra.mxu0 0.0
    %317 = vmatprep.subr.mxu0 0.0
    %318 = vmatpush1.msra.mxu0 0.0
    %319 = vmatprep.subr.mxu0 0.0
    %320 = vmatpush1.msra.mxu0 0.0
    %321 = vmatprep.subr.mxu0 0.0
    %322 = vmatpush1.msra.mxu0 0.0
    %323 = vmatprep.subr.mxu0 0.0
    %324 = vmatpush1.msra.mxu0 0.0
    %325 = vmatprep.subr.mxu0 0.0
    %326 = vmatpush1.msra.mxu0 0.0
    %327 = vmatprep.subr.mxu0 0.0
    %328 = vmatpush1.msra.mxu0 0.0
    %329 = vmatprep.subr.mxu0 0.0
    %330 = vmatpush1.msra.mxu0 0.0
    %331 = vmatprep.subr.mxu0 0.0
    %332 = vmatpush1.msra.mxu0 0.0
    %333 = vmatprep.subr.mxu0 0.0
    %334 = vmatpush1.msra.mxu0 0.0
    %335 = vmatprep.subr.mxu0 0.0
    %336 = vmatpush1.msra.mxu0 0.0
    %337 = vmatprep.subr.mxu0 0.0
    %338 = vmatpush1.msra.mxu0 0.0
    %339 = vmatprep.subr.mxu0 0.0
    %340 = vmatpush1.msra.mxu0 0.0
    %341 = vmatprep.subr.mxu0 0.0
    %342 = vmatpush1.msra.mxu0 0.0
    %343 = vmatprep.mubr.f32.mxu0 0.0
    %344 = vmatmul.mubr.f32.gmra.mrb[0].mxu0 %v65
    %v345 = vpop.f32.mrb[0].mxu0
    %v346 = vadd.f32 %v177, %v345
    %v347 = vpop.f32.mrb[0].mxu0
    %v348 = vadd.f32 %v181, %v347
    %349 = vmatprep.mubr.f32.mxu0 0.0
    %350 = vmatmul.mubr.f32.gmra.mrb[0].mxu0 %v66
    %v351 = vpop.f32.mrb[0].mxu0
    %v352 = vadd.f32 %v177, %v351
    %v353 = vpop.f32.mrb[0].mxu0
    %v354 = vadd.f32 %v181, %v353
    %355 = vmatprep.mubr.f32.mxu0 0.0
    %356 = vmatmul.mubr.f32.gmra.mrb[0].mxu0 %v67
    %v357 = vpop.f32.mrb[0].mxu0
    %v358 = vadd.f32 %v177, %v357
    %v359 = vpop.f32.mrb[0].mxu0
    %v360 = vadd.f32 %v181, %v359
    %361 = vdwg.mxu0
    %362 = vmatprep.subr.mxu0 %v73
    %363 = vmatpush1.msra.mxu0 %v72
    %364 = vmatprep.subr.mxu0 %v79
    %365 = vmatpush1.msra.mxu0 %v78
    %366 = vmatprep.subr.mxu0 %v85
    %367 = vmatpush1.msra.mxu0 %v84
    %368 = vmatprep.subr.mxu0 %v91
    %369 = vmatpush1.msra.mxu0 %v90
    %370 = vmatprep.subr.mxu0 %v97
    %371 = vmatpush1.msra.mxu0 %v96
    %372 = vmatprep.subr.mxu0 %v103
    %373 = vmatpush1.msra.mxu0 %v102
    %374 = vmatprep.subr.mxu0 %v109
    %375 = vmatpush1.msra.mxu0 %v108
    %376 = vmatprep.subr.mxu0 %v115
    %377 = vmatpush1.msra.mxu0 %v114
    %378 = vmatprep.subr.mxu0 %v121
    %379 = vmatpush1.msra.mxu0 %v120
    %380 = vmatprep.subr.mxu0 %v127
    %381 = vmatpush1.msra.mxu0 %v126
    %382 = vmatprep.subr.mxu0 %v133
    %383 = vmatpush1.msra.mxu0 %v132
    %384 = vmatprep.subr.mxu0 %v139
    %385 = vmatpush1.msra.mxu0 %v138
    %386 = vmatprep.subr.mxu0 %v145
    %387 = vmatpush1.msra.mxu0 %v144
    %388 = vmatprep.subr.mxu0 %v151
    %389 = vmatpush1.msra.mxu0 %v150
    %390 = vmatprep.subr.mxu0 %v157
    %391 = vmatpush1.msra.mxu0 %v156
    %392 = vmatprep.subr.mxu0 %v163
    %393 = vmatpush1.msra.mxu0 %v162
    %394 = vmatprep.subr.mxu0 0.0
    %395 = vmatpush1.msra.mxu0 0.0
    %396 = vmatprep.subr.mxu0 0.0
    %397 = vmatpush1.msra.mxu0 0.0
    %398 = vmatprep.subr.mxu0 0.0
    %399 = vmatpush1.msra.mxu0 0.0
    %400 = vmatprep.subr.mxu0 0.0
    %401 = vmatpush1.msra.mxu0 0.0
    %402 = vmatprep.subr.mxu0 0.0
    %403 = vmatpush1.msra.mxu0 0.0
    %404 = vmatprep.subr.mxu0 0.0
    %405 = vmatpush1.msra.mxu0 0.0
    %406 = vmatprep.subr.mxu0 0.0
    %407 = vmatpush1.msra.mxu0 0.0
    %408 = vmatprep.subr.mxu0 0.0
    %409 = vmatpush1.msra.mxu0 0.0
    %410 = vmatprep.subr.mxu0 0.0
    %411 = vmatpush1.msra.mxu0 0.0
    %412 = vmatprep.subr.mxu0 0.0
    %413 = vmatpush1.msra.mxu0 0.0
    %414 = vmatprep.subr.mxu0 0.0
    %415 = vmatpush1.msra.mxu0 0.0
    %416 = vmatprep.subr.mxu0 0.0
    %417 = vmatpush1.msra.mxu0 0.0
    %418 = vmatprep.subr.mxu0 0.0
    %419 = vmatpush1.msra.mxu0 0.0
    %420 = vmatprep.subr.mxu0 0.0
    %421 = vmatpush1.msra.mxu0 0.0
    %422 = vmatprep.subr.mxu0 0.0
    %423 = vmatpush1.msra.mxu0 0.0
    %424 = vmatprep.subr.mxu0 0.0
    %425 = vmatpush1.msra.mxu0 0.0
    %426 = vmatprep.mubr.f32.mxu0 0.0
    %427 = vmatmul.mubr.f32.gmra.mrb[0].mxu0 %v65
    %v428 = vpop.f32.mrb[0].mxu0
    %v429 = vadd.f32 %v185, %v428
    %v430 = vpop.f32.mrb[0].mxu0
    %v431 = vadd.f32 %v189, %v430
    %432 = vmatprep.mubr.f32.mxu0 0.0
    %433 = vmatmul.mubr.f32.gmra.mrb[0].mxu0 %v66
    %v434 = vpop.f32.mrb[0].mxu0
    %v435 = vadd.f32 %v185, %v434
    %v436 = vpop.f32.mrb[0].mxu0
    %v437 = vadd.f32 %v189, %v436
    %438 = vmatprep.mubr.f32.mxu0 0.0
    %439 = vmatmul.mubr.f32.gmra.mrb[0].mxu0 %v67
    %v440 = vpop.f32.mrb[0].mxu0
    %v441 = vadd.f32 %v185, %v440
    %v442 = vpop.f32.mrb[0].mxu0
    %v443 = vadd.f32 %v189, %v442
    %444 = vdwg.mxu0
    %445 = vst [vmem:[#allocation2] sm:$0xff] %v263
    %446 = vst [vmem:[#allocation2 + $0x8] sm:$0xff] %v265
    %447 = vst [vmem:[#allocation2 + $0x10] sm:$0xff] %v346
    %448 = vst [vmem:[#allocation2 + $0x18] sm:$0xff] %v348
    %449 = vst [vmem:[#allocation2 + $0x20] sm:$0xff] %v429
    %450 = vst [vmem:[#allocation2 + $0x28] sm:$0xff] %v431
    %451 = vst [vmem:[#allocation2 + $0x30] sm:$0xff] %v269
    %452 = vst [vmem:[#allocation2 + $0x38] sm:$0xff] %v271
    %453 = vst [vmem:[#allocation2 + $0x40] sm:$0xff] %v352
    %454 = vst [vmem:[#allocation2 + $0x48] sm:$0xff] %v354
    %455 = vst [vmem:[#allocation2 + $0x50] sm:$0xff] %v435
    %456 = vst [vmem:[#allocation2 + $0x58] sm:$0xff] %v437
    %457 = vst [vmem:[#allocation2 + $0x60] sm:$0xff] %v275
    %458 = vst [vmem:[#allocation2 + $0x68] sm:$0xff] %v277
    %459 = vst [vmem:[#allocation2 + $0x70] sm:$0xff] %v358
    %460 = vst [vmem:[#allocation2 + $0x78] sm:$0xff] %v360
    %461 = vst [vmem:[#allocation2 + $0x80] sm:$0xff] %v441
    %462 = vst [vmem:[#allocation2 + $0x88] sm:$0xff] %v443
    %s463 = smul.u32 0, 6
    %s464 = smul.addr %s463, 8
    %s465 = scalar_lea.vmem [#allocation2], %s464
    %v466 = vld [vmem:[%s465] sm:$0xff]
    %v467 = vld [vmem:[%s465 + $0x8] sm:$0xff]
    %v468 = vld [vmem:[%s465 + $0x10] sm:$0xff]
    %v469 = vld [vmem:[%s465 + $0x18] sm:$0xff]
    %v470 = vld [vmem:[%s465 + $0x20] sm:$0xff]
    %v471 = vld [vmem:[%s465 + $0x28] sm:$0xff]
    %v472 = vld [vmem:[#allocation4] sm:$0xff]
    %v473 = vld [vmem:[#allocation10] sm:$0xff]
    %v474 = vld [vmem:[#allocation10 + $0x8] sm:$0xff]
    %v475 = vld [vmem:[#allocation10 + $0x10] sm:$0xff]
    %v476 = vld [vmem:[#allocation10 + $0x18] sm:$0xff]
    %v477 = vld [vmem:[#allocation10 + $0x20] sm:$0xff]
    %v478 = vld [vmem:[#allocation10 + $0x28] sm:$0xff]
    %v479 = vld [vmem:[#allocation10 + $0x30] sm:$0xff]
    %v480 = vld [vmem:[#allocation10 + $0x38] sm:$0xff]
    %v481 = vld [vmem:[#allocation10 + $0x40] sm:$0xff]
    %v482 = vld [vmem:[#allocation10 + $0x48] sm:$0xff]
    %v483 = vld [vmem:[#allocation10 + $0x50] sm:$0xff]
    %v484 = vld [vmem:[#allocation10 + $0x58] sm:$0xff]
    %v485 = vld [vmem:[#allocation10 + $0x60] sm:$0xff]
    %v486 = vld [vmem:[#allocation10 + $0x68] sm:$0xff]
    %v487 = vld [vmem:[#allocation10 + $0x70] sm:$0xff]
    %v488 = vld [vmem:[#allocation10 + $0x78] sm:$0xff]
    %v489 = vld [vmem:[#allocation10 + $0x80] sm:$0xff]
    %v490 = vld [vmem:[#allocation10 + $0x88] sm:$0xff]
    %v491 = vld [vmem:[#allocation10 + $0x90] sm:$0xff]
    %v492 = vld [vmem:[#allocation10 + $0x98] sm:$0xff]
    %v493 = vld [vmem:[#allocation10 + $0xa0] sm:$0xff]
    %v494 = vld [vmem:[#allocation10 + $0xa8] sm:$0xff]
    %v495 = vld [vmem:[#allocation10 + $0xb0] sm:$0xff]
    %v496 = vld [vmem:[#allocation10 + $0xb8] sm:$0xff]
    %v497 = vld [vmem:[#allocation10 + $0xc0] sm:$0xff]
    %v498 = vld [vmem:[#allocation10 + $0xc8] sm:$0xff]
    %v499 = vld [vmem:[#allocation10 + $0xd0] sm:$0xff]
    %v500 = vld [vmem:[#allocation10 + $0xd8] sm:$0xff]
    %v501 = vld [vmem:[#allocation10 + $0xe0] sm:$0xff]
    %v502 = vld [vmem:[#allocation10 + $0xe8] sm:$0xff]
    %v503 = vld [vmem:[#allocation10 + $0xf0] sm:$0xff]
    %v504 = vld [vmem:[#allocation10 + $0xf8] sm:$0xff]
    %v505 = vld [vmem:[#allocation10 + $0x100] sm:$0xff]
    %v506 = vld [vmem:[#allocation10 + $0x108] sm:$0xff]
    %v507 = vld [vmem:[#allocation10 + $0x110] sm:$0xff]
    %v508 = vld [vmem:[#allocation10 + $0x118] sm:$0xff]
    %v509 = vld [vmem:[#allocation10 + $0x120] sm:$0xff]
    %v510 = vld [vmem:[#allocation10 + $0x128] sm:$0xff]
    %v511 = vld [vmem:[#allocation10 + $0x130] sm:$0xff]
    %v512 = vld [vmem:[#allocation10 + $0x138] sm:$0xff]
    %v513 = vld [vmem:[#allocation10 + $0x140] sm:$0xff]
    %v514 = vld [vmem:[#allocation10 + $0x148] sm:$0xff]
    %v515 = vld [vmem:[#allocation10 + $0x150] sm:$0xff]
    %v516 = vld [vmem:[#allocation10 + $0x158] sm:$0xff]
    %v517 = vld [vmem:[#allocation10 + $0x160] sm:$0xff]
    %v518 = vld [vmem:[#allocation10 + $0x168] sm:$0xff]
    %v519 = vld [vmem:[#allocation10 + $0x170] sm:$0xff]
    %v520 = vld [vmem:[#allocation10 + $0x178] sm:$0xff]
    %v521 = vld [vmem:[#allocation10 + $0x180] sm:$0xff]
    %v522 = vld [vmem:[#allocation10 + $0x188] sm:$0xff]
    %v523 = vld [vmem:[#allocation10 + $0x190] sm:$0xff]
    %v524 = vld [vmem:[#allocation10 + $0x198] sm:$0xff]
    %v525 = vld [vmem:[#allocation10 + $0x1a0] sm:$0xff]
    %v526 = vld [vmem:[#allocation10 + $0x1a8] sm:$0xff]
    %v527 = vld [vmem:[#allocation10 + $0x1b0] sm:$0xff]
    %v528 = vld [vmem:[#allocation10 + $0x1b8] sm:$0xff]
    %v529 = vld [vmem:[#allocation10 + $0x1c0] sm:$0xff]
    %v530 = vld [vmem:[#allocation10 + $0x1c8] sm:$0xff]
    %v531 = vld [vmem:[#allocation10 + $0x1d0] sm:$0xff]
    %v532 = vld [vmem:[#allocation10 + $0x1d8] sm:$0xff]
    %v533 = vld [vmem:[#allocation10 + $0x1e0] sm:$0xff]
    %v534 = vld [vmem:[#allocation10 + $0x1e8] sm:$0xff]
    %v535 = vld [vmem:[#allocation10 + $0x1f0] sm:$0xff]
    %v536 = vld [vmem:[#allocation10 + $0x1f8] sm:$0xff]
    %v537 = vld [vmem:[#allocation10 + $0x200] sm:$0xff]
    %v538 = vld [vmem:[#allocation10 + $0x208] sm:$0xff]
    %v539 = vld [vmem:[#allocation10 + $0x210] sm:$0xff]
    %v540 = vld [vmem:[#allocation10 + $0x218] sm:$0xff]
    %v541 = vld [vmem:[#allocation10 + $0x220] sm:$0xff]
    %v542 = vld [vmem:[#allocation10 + $0x228] sm:$0xff]
    %v543 = vld [vmem:[#allocation10 + $0x230] sm:$0xff]
    %v544 = vld [vmem:[#allocation10 + $0x238] sm:$0xff]
    %v545 = vld [vmem:[#allocation10 + $0x240] sm:$0xff]
    %v546 = vld [vmem:[#allocation10 + $0x248] sm:$0xff]
    %v547 = vld [vmem:[#allocation10 + $0x250] sm:$0xff]
    %v548 = vld [vmem:[#allocation10 + $0x258] sm:$0xff]
    %v549 = vld [vmem:[#allocation10 + $0x260] sm:$0xff]
    %v550 = vld [vmem:[#allocation10 + $0x268] sm:$0xff]
    %v551 = vld [vmem:[#allocation10 + $0x270] sm:$0xff]
    %v552 = vld [vmem:[#allocation10 + $0x278] sm:$0xff]
    %553 = vmatprep.subr.mxu0 %v474
    %554 = vmatpush1.msra.mxu0 %v473
    %555 = vmatprep.subr.mxu0 %v479
    %556 = vmatpush1.msra.mxu0 %v478
    %557 = vmatprep.subr.mxu0 %v484
    %558 = vmatpush1.msra.mxu0 %v483
    %559 = vmatprep.subr.mxu0 %v489
    %560 = vmatpush1.msra.mxu0 %v488
    %561 = vmatprep.subr.mxu0 %v494
    %562 = vmatpush1.msra.mxu0 %v493
    %563 = vmatprep.subr.mxu0 %v499
    %564 = vmatpush1.msra.mxu0 %v498
    %565 = vmatprep.subr.mxu0 %v504
    %566 = vmatpush1.msra.mxu0 %v503
    %567 = vmatprep.subr.mxu0 %v509
    %568 = vmatpush1.msra.mxu0 %v508
    %569 = vmatprep.subr.mxu0 %v514
    %570 = vmatpush1.msra.mxu0 %v513
    %571 = vmatprep.subr.mxu0 %v519
    %572 = vmatpush1.msra.mxu0 %v518
    %573 = vmatprep.subr.mxu0 %v524
    %574 = vmatpush1.msra.mxu0 %v523
    %575 = vmatprep.subr.mxu0 %v529
    %576 = vmatpush1.msra.mxu0 %v528
    %577 = vmatprep.subr.mxu0 %v534
    %578 = vmatpush1.msra.mxu0 %v533
    %579 = vmatprep.subr.mxu0 %v539
    %580 = vmatpush1.msra.mxu0 %v538
    %581 = vmatprep.subr.mxu0 %v544
    %582 = vmatpush1.msra.mxu0 %v543
    %583 = vmatprep.subr.mxu0 %v549
    %584 = vmatpush1.msra.mxu0 %v548
    %585 = vmatprep.subr.mxu0 0.0
    %586 = vmatpush1.msra.mxu0 0.0
    %587 = vmatprep.subr.mxu0 0.0
    %588 = vmatpush1.msra.mxu0 0.0
    %589 = vmatprep.subr.mxu0 0.0
    %590 = vmatpush1.msra.mxu0 0.0
    %591 = vmatprep.subr.mxu0 0.0
    %592 = vmatpush1.msra.mxu0 0.0
    %593 = vmatprep.subr.mxu0 0.0
    %594 = vmatpush1.msra.mxu0 0.0
    %595 = vmatprep.subr.mxu0 0.0
    %596 = vmatpush1.msra.mxu0 0.0
    %597 = vmatprep.subr.mxu0 0.0
    %598 = vmatpush1.msra.mxu0 0.0
    %599 = vmatprep.subr.mxu0 0.0
    %600 = vmatpush1.msra.mxu0 0.0
    %601 = vmatprep.subr.mxu0 0.0
    %602 = vmatpush1.msra.mxu0 0.0
    %603 = vmatprep.subr.mxu0 0.0
    %604 = vmatpush1.msra.mxu0 0.0
    %605 = vmatprep.subr.mxu0 0.0
    %606 = vmatpush1.msra.mxu0 0.0
    %607 = vmatprep.subr.mxu0 0.0
    %608 = vmatpush1.msra.mxu0 0.0
    %609 = vmatprep.subr.mxu0 0.0
    %610 = vmatpush1.msra.mxu0 0.0
    %611 = vmatprep.subr.mxu0 0.0
    %612 = vmatpush1.msra.mxu0 0.0
    %613 = vmatprep.subr.mxu0 0.0
    %614 = vmatpush1.msra.mxu0 0.0
    %615 = vmatprep.subr.mxu0 0.0
    %616 = vmatpush1.msra.mxu0 0.0
    %617 = vmatprep.mubr.f32.mxu0 0.0
    %618 = vmatmul.mubr.f32.gmra.mrb[0].mxu0 %v472
    %v619 = vpop.f32.mrb[0].mxu0
    %v620 = vadd.f32 0.0, %v619
    %v621 = vpop.f32.mrb[0].mxu0
    %v622 = vadd.f32 0.0, %v621
    %623 = vdwg.mxu0
    %624 = vmatprep.subr.mxu0 %v476
    %625 = vmatpush1.msra.mxu0 %v475
    %626 = vmatprep.subr.mxu0 %v481
    %627 = vmatpush1.msra.mxu0 %v480
    %628 = vmatprep.subr.mxu0 %v486
    %629 = vmatpush1.msra.mxu0 %v485
    %630 = vmatprep.subr.mxu0 %v491
    %631 = vmatpush1.msra.mxu0 %v490
    %632 = vmatprep.subr.mxu0 %v496
    %633 = vmatpush1.msra.mxu0 %v495
    %634 = vmatprep.subr.mxu0 %v501
    %635 = vmatpush1.msra.mxu0 %v500
    %636 = vmatprep.subr.mxu0 %v506
    %637 = vmatpush1.msra.mxu0 %v505
    %638 = vmatprep.subr.mxu0 %v511
    %639 = vmatpush1.msra.mxu0 %v510
    %640 = vmatprep.subr.mxu0 %v516
    %641 = vmatpush1.msra.mxu0 %v515
    %642 = vmatprep.subr.mxu0 %v521
    %643 = vmatpush1.msra.mxu0 %v520
    %644 = vmatprep.subr.mxu0 %v526
    %645 = vmatpush1.msra.mxu0 %v525
    %646 = vmatprep.subr.mxu0 %v531
    %647 = vmatpush1.msra.mxu0 %v530
    %648 = vmatprep.subr.mxu0 %v536
    %649 = vmatpush1.msra.mxu0 %v535
    %650 = vmatprep.subr.mxu0 %v541
    %651 = vmatpush1.msra.mxu0 %v540
    %652 = vmatprep.subr.mxu0 %v546
    %653 = vmatpush1.msra.mxu0 %v545
    %654 = vmatprep.subr.mxu0 %v551
    %655 = vmatpush1.msra.mxu0 %v550
    %656 = vmatprep.subr.mxu0 0.0
    %657 = vmatpush1.msra.mxu0 0.0
    %658 = vmatprep.subr.mxu0 0.0
    %659 = vmatpush1.msra.mxu0 0.0
    %660 = vmatprep.subr.mxu0 0.0
    %661 = vmatpush1.msra.mxu0 0.0
    %662 = vmatprep.subr.mxu0 0.0
    %663 = vmatpush1.msra.mxu0 0.0
    %664 = vmatprep.subr.mxu0 0.0
    %665 = vmatpush1.msra.mxu0 0.0
    %666 = vmatprep.subr.mxu0 0.0
    %667 = vmatpush1.msra.mxu0 0.0
    %668 = vmatprep.subr.mxu0 0.0
    %669 = vmatpush1.msra.mxu0 0.0
    %670 = vmatprep.subr.mxu0 0.0
    %671 = vmatpush1.msra.mxu0 0.0
    %672 = vmatprep.subr.mxu0 0.0
    %673 = vmatpush1.msra.mxu0 0.0
    %674 = vmatprep.subr.mxu0 0.0
    %675 = vmatpush1.msra.mxu0 0.0
    %676 = vmatprep.subr.mxu0 0.0
    %677 = vmatpush1.msra.mxu0 0.0
    %678 = vmatprep.subr.mxu0 0.0
    %679 = vmatpush1.msra.mxu0 0.0
    %680 = vmatprep.subr.mxu0 0.0
    %681 = vmatpush1.msra.mxu0 0.0
    %682 = vmatprep.subr.mxu0 0.0
    %683 = vmatpush1.msra.mxu0 0.0
    %684 = vmatprep.subr.mxu0 0.0
    %685 = vmatpush1.msra.mxu0 0.0
    %686 = vmatprep.subr.mxu0 0.0
    %687 = vmatpush1.msra.mxu0 0.0
    %688 = vmatprep.mubr.f32.mxu0 0.0
    %689 = vmatmul.mubr.f32.gmra.mrb[0].mxu0 %v472
    %v690 = vpop.f32.mrb[0].mxu0
    %v691 = vadd.f32 0.0, %v690
    %v692 = vpop.f32.mrb[0].mxu0
    %v693 = vadd.f32 0.0, %v692
    %694 = vdwg.mxu0
    %695 = vmatprep.subr.mxu0 0.0
    %696 = vmatpush1.msra.mxu0 %v477
    %697 = vmatprep.subr.mxu0 0.0
    %698 = vmatpush1.msra.mxu0 %v482
    %699 = vmatprep.subr.mxu0 0.0
    %700 = vmatpush1.msra.mxu0 %v487
    %701 = vmatprep.subr.mxu0 0.0
    %702 = vmatpush1.msra.mxu0 %v492
    %703 = vmatprep.subr.mxu0 0.0
    %704 = vmatpush1.msra.mxu0 %v497
    %705 = vmatprep.subr.mxu0 0.0
    %706 = vmatpush1.msra.mxu0 %v502
    %707 = vmatprep.subr.mxu0 0.0
    %708 = vmatpush1.msra.mxu0 %v507
    %709 = vmatprep.subr.mxu0 0.0
    %710 = vmatpush1.msra.mxu0 %v512
    %711 = vmatprep.subr.mxu0 0.0
    %712 = vmatpush1.msra.mxu0 %v517
    %713 = vmatprep.subr.mxu0 0.0
    %714 = vmatpush1.msra.mxu0 %v522
    %715 = vmatprep.subr.mxu0 0.0
    %716 = vmatpush1.msra.mxu0 %v527
    %717 = vmatprep.subr.mxu0 0.0
    %718 = vmatpush1.msra.mxu0 %v532
    %719 = vmatprep.subr.mxu0 0.0
    %720 = vmatpush1.msra.mxu0 %v537
    %721 = vmatprep.subr.mxu0 0.0
    %722 = vmatpush1.msra.mxu0 %v542
    %723 = vmatprep.subr.mxu0 0.0
    %724 = vmatpush1.msra.mxu0 %v547
    %725 = vmatprep.subr.mxu0 0.0
    %726 = vmatpush1.msra.mxu0 %v552
    %727 = vmatprep.subr.mxu0 0.0
    %728 = vmatpush1.msra.mxu0 0.0
    %729 = vmatprep.subr.mxu0 0.0
    %730 = vmatpush1.msra.mxu0 0.0
    %731 = vmatprep.subr.mxu0 0.0
    %732 = vmatpush1.msra.mxu0 0.0
    %733 = vmatprep.subr.mxu0 0.0
    %734 = vmatpush1.msra.mxu0 0.0
    %735 = vmatprep.subr.mxu0 0.0
    %736 = vmatpush1.msra.mxu0 0.0
    %737 = vmatprep.subr.mxu0 0.0
    %738 = vmatpush1.msra.mxu0 0.0
    %739 = vmatprep.subr.mxu0 0.0
    %740 = vmatpush1.msra.mxu0 0.0
    %741 = vmatprep.subr.mxu0 0.0
    %742 = vmatpush1.msra.mxu0 0.0
    %743 = vmatprep.subr.mxu0 0.0
    %744 = vmatpush1.msra.mxu0 0.0
    %745 = vmatprep.subr.mxu0 0.0
    %746 = vmatpush1.msra.mxu0 0.0
    %747 = vmatprep.subr.mxu0 0.0
    %748 = vmatpush1.msra.mxu0 0.0
    %749 = vmatprep.subr.mxu0 0.0
    %750 = vmatpush1.msra.mxu0 0.0
    %751 = vmatprep.subr.mxu0 0.0
    %752 = vmatpush1.msra.mxu0 0.0
    %753 = vmatprep.subr.mxu0 0.0
    %754 = vmatpush1.msra.mxu0 0.0
    %755 = vmatprep.subr.mxu0 0.0
    %756 = vmatpush1.msra.mxu0 0.0
    %757 = vmatprep.subr.mxu0 0.0
    %758 = vmatpush1.msra.mxu0 0.0
    %759 = vmatprep.mubr.f32.mxu0 0.0
    %760 = vmatmul.mubr.f32.gmra.mrb[0].mxu0 %v472
    %v761 = vpop.f32.mrb[0].mxu0
    %v762 = vadd.f32 0.0, %v761
    %v763 = vpop.f32.mrb[0].mxu0
    %764 = vdwg.mxu0
    %v765 = vadd.f32 %v466, %v620
    %v766 = vadd.f32 %v467, %v622
    %v767 = vadd.f32 %v468, %v691
    %v768 = vadd.f32 %v469, %v693
    %v769 = vadd.f32 %v470, %v762
    %v770 = vxor.u32 %v765, 2147483648
    %v771 = vmul.f32 %v770, 1.442695
    %v772 = vpow.pop %v771
    %v773 = vadd.f32 %v772, 1.0
    %v774 = vrcp.pop %v773
    %v775 = vmul.f32 1.0, %v774
    %v776 = vxor.u32 %v766, 2147483648
    %v777 = vmul.f32 %v776, 1.442695
    %v778 = vpow.pop %v777
    %v779 = vadd.f32 %v778, 1.0
    %v780 = vrcp.pop %v779
    %v781 = vmul.f32 1.0, %v780
    %v782 = vxor.u32 %v767, 2147483648
    %v783 = vmul.f32 %v782, 1.442695
    %v784 = vpow.pop %v783
    %v785 = vadd.f32 %v784, 1.0
    %v786 = vrcp.pop %v785
    %v787 = vmul.f32 1.0, %v786
    %v788 = vtanh.pop %v768
    %v789 = vxor.u32 %v769, 2147483648
    %v790 = vmul.f32 %v789, 1.442695
    %v791 = vpow.pop %v790
    %v792 = vadd.f32 %v791, 1.0
    %v793 = vrcp.pop %v792
    %v794 = vmul.f32 1.0, %v793
    %v795 = vmul.f32 %v775, %v788
    %v796 = vld [vmem:[#allocation3] sm:$0xff]
    %v797 = vmul.f32 %v787, %v796
    %v798 = vadd.f32 %v795, %v797
    %v799 = vtanh.pop %v798
    %v800 = vmul.f32 %v781, %v799
    %v801 = vmul.f32 %v794, %v800
    %v802 = vsub.f32 1.0, %v794
    %v803 = vmul.f32 %v802, %v471
    %v804 = vadd.f32 %v801, %v803
    %805 = vst [vmem:[#allocation3] sm:$0xff] %v798
    %806 = vst [vmem:[#allocation4] sm:$0xff] %v804
    %807 = vst [vmem:[#allocation11] sm:$0xff] %v804
    %s808 = smul.u32 1, 6
    %s809 = smul.addr %s808, 8
    %s810 = scalar_lea.vmem [#allocation2], %s809
    %v811 = vld [vmem:[%s810] sm:$0xff]
    %v812 = vld [vmem:[%s810 + $0x8] sm:$0xff]
    %v813 = vld [vmem:[%s810 + $0x10] sm:$0xff]
    %v814 = vld [vmem:[%s810 + $0x18] sm:$0xff]
    %v815 = vld [vmem:[%s810 + $0x20] sm:$0xff]
    %v816 = vld [vmem:[%s810 + $0x28] sm:$0xff]
    %v817 = vld [vmem:[#allocation4] sm:$0xff]
    %v818 = vld [vmem:[#allocation10] sm:$0xff]
    %v819 = vld [vmem:[#allocation10 + $0x8] sm:$0xff]
    %v820 = vld [vmem:[#allocation10 + $0x10] sm:$0xff]
    %v821 = vld [vmem:[#allocation10 + $0x18] sm:$0xff]
    %v822 = vld [vmem:[#allocation10 + $0x20] sm:$0xff]
    %v823 = vld [vmem:[#allocation10 + $0x28] sm:$0xff]
    %v824 = vld [vmem:[#allocation10 + $0x30] sm:$0xff]
    %v825 = vld [vmem:[#allocation10 + $0x38] sm:$0xff]
    %v826 = vld [vmem:[#allocation10 + $0x40] sm:$0xff]
    %v827 = vld [vmem:[#allocation10 + $0x48] sm:$0xff]
    %v828 = vld [vmem:[#allocation10 + $0x50] sm:$0xff]
    %v829 = vld [vmem:[#allocation10 + $0x58] sm:$0xff]
    %v830 = vld [vmem:[#allocation10 + $0x60] sm:$0xff]
    %v831 = vld [vmem:[#allocation10 + $0x68] sm:$0xff]
    %v832 = vld [vmem:[#allocation10 + $0x70] sm:$0xff]
    %v833 = vld [vmem:[#allocation10 + $0x78] sm:$0xff]
    %v834 = vld [vmem:[#allocation10 + $0x80] sm:$0xff]
    %v835 = vld [vmem:[#allocation10 + $0x88] sm:$0xff]
    %v836 = vld [vmem:[#allocation10 + $0x90] sm:$0xff]
    %v837 = vld [vmem:[#allocation10 + $0x98] sm:$0xff]
    %v838 = vld [vmem:[#allocation10 + $0xa0] sm:$0xff]
    %v839 = vld [vmem:[#allocation10 + $0xa8] sm:$0xff]
    %v840 = vld [vmem:[#allocation10 + $0xb0] sm:$0xff]
    %v841 = vld [vmem:[#allocation10 + $0xb8] sm:$0xff]
    %v842 = vld [vmem:[#allocation10 + $0xc0] sm:$0xff]
    %v843 = vld [vmem:[#allocation10 + $0xc8] sm:$0xff]
    %v844 = vld [vmem:[#allocation10 + $0xd0] sm:$0xff]
    %v845 = vld [vmem:[#allocation10 + $0xd8] sm:$0xff]
    %v846 = vld [vmem:[#allocation10 + $0xe0] sm:$0xff]
    %v847 = vld [vmem:[#allocation10 + $0xe8] sm:$0xff]
    %v848 = vld [vmem:[#allocation10 + $0xf0] sm:$0xff]
    %v849 = vld [vmem:[#allocation10 + $0xf8] sm:$0xff]
    %v850 = vld [vmem:[#allocation10 + $0x100] sm:$0xff]
    %v851 = vld [vmem:[#allocation10 + $0x108] sm:$0xff]
    %v852 = vld [vmem:[#allocation10 + $0x110] sm:$0xff]
    %v853 = vld [vmem:[#allocation10 + $0x118] sm:$0xff]
    %v854 = vld [vmem:[#allocation10 + $0x120] sm:$0xff]
    %v855 = vld [vmem:[#allocation10 + $0x128] sm:$0xff]
    %v856 = vld [vmem:[#allocation10 + $0x130] sm:$0xff]
    %v857 = vld [vmem:[#allocation10 + $0x138] sm:$0xff]
    %v858 = vld [vmem:[#allocation10 + $0x140] sm:$0xff]
    %v859 = vld [vmem:[#allocation10 + $0x148] sm:$0xff]
    %v860 = vld [vmem:[#allocation10 + $0x150] sm:$0xff]
    %v861 = vld [vmem:[#allocation10 + $0x158] sm:$0xff]
    %v862 = vld [vmem:[#allocation10 + $0x160] sm:$0xff]
    %v863 = vld [vmem:[#allocation10 + $0x168] sm:$0xff]
    %v864 = vld [vmem:[#allocation10 + $0x170] sm:$0xff]
    %v865 = vld [vmem:[#allocation10 + $0x178] sm:$0xff]
    %v866 = vld [vmem:[#allocation10 + $0x180] sm:$0xff]
    %v867 = vld [vmem:[#allocation10 + $0x188] sm:$0xff]
    %v868 = vld [vmem:[#allocation10 + $0x190] sm:$0xff]
    %v869 = vld [vmem:[#allocation10 + $0x198] sm:$0xff]
    %v870 = vld [vmem:[#allocation10 + $0x1a0] sm:$0xff]
    %v871 = vld [vmem:[#allocation10 + $0x1a8] sm:$0xff]
    %v872 = vld [vmem:[#allocation10 + $0x1b0] sm:$0xff]
    %v873 = vld [vmem:[#allocation10 + $0x1b8] sm:$0xff]
    %v874 = vld [vmem:[#allocation10 + $0x1c0] sm:$0xff]
    %v875 = vld [vmem:[#allocation10 + $0x1c8] sm:$0xff]
    %v876 = vld [vmem:[#allocation10 + $0x1d0] sm:$0xff]
    %v877 = vld [vmem:[#allocation10 + $0x1d8] sm:$0xff]
    %v878 = vld [vmem:[#allocation10 + $0x1e0] sm:$0xff]
    %v879 = vld [vmem:[#allocation10 + $0x1e8] sm:$0xff]
    %v880 = vld [vmem:[#allocation10 + $0x1f0] sm:$0xff]
    %v881 = vld [vmem:[#allocation10 + $0x1f8] sm:$0xff]
    %v882 = vld [vmem:[#allocation10 + $0x200] sm:$0xff]
    %v883 = vld [vmem:[#allocation10 + $0x208] sm:$0xff]
    %v884 = vld [vmem:[#allocation10 + $0x210] sm:$0xff]
    %v885 = vld [vmem:[#allocation10 + $0x218] sm:$0xff]
    %v886 = vld [vmem:[#allocation10 + $0x220] sm:$0xff]
    %v887 = vld [vmem:[#allocation10 + $0x228] sm:$0xff]
    %v888 = vld [vmem:[#allocation10 + $0x230] sm:$0xff]
    %v889 = vld [vmem:[#allocation10 + $0x238] sm:$0xff]
    %v890 = vld [vmem:[#allocation10 + $0x240] sm:$0xff]
    %v891 = vld [vmem:[#allocation10 + $0x248] sm:$0xff]
    %v892 = vld [vmem:[#allocation10 + $0x250] sm:$0xff]
    %v893 = vld [vmem:[#allocation10 + $0x258] sm:$0xff]
    %v894 = vld [vmem:[#allocation10 + $0x260] sm:$0xff]
    %v895 = vld [vmem:[#allocation10 + $0x268] sm:$0xff]
    %v896 = vld [vmem:[#allocation10 + $0x270] sm:$0xff]
    %v897 = vld [vmem:[#allocation10 + $0x278] sm:$0xff]
    %898 = vmatprep.subr.mxu0 %v819
    %899 = vmatpush1.msra.mxu0 %v818
    %900 = vmatprep.subr.mxu0 %v824
    %901 = vmatpush1.msra.mxu0 %v823
    %902 = vmatprep.subr.mxu0 %v829
    %903 = vmatpush1.msra.mxu0 %v828
    %904 = vmatprep.subr.mxu0 %v834
    %905 = vmatpush1.msra.mxu0 %v833
    %906 = vmatprep.subr.mxu0 %v839
    %907 = vmatpush1.msra.mxu0 %v838
    %908 = vmatprep.subr.mxu0 %v844
    %909 = vmatpush1.msra.mxu0 %v843
    %910 = vmatprep.subr.mxu0 %v849
    %911 = vmatpush1.msra.mxu0 %v848
    %912 = vmatprep.subr.mxu0 %v854
    %913 = vmatpush1.msra.mxu0 %v853
    %914 = vmatprep.subr.mxu0 %v859
    %915 = vmatpush1.msra.mxu0 %v858
    %916 = vmatprep.subr.mxu0 %v864
    %917 = vmatpush1.msra.mxu0 %v863
    %918 = vmatprep.subr.mxu0 %v869
    %919 = vmatpush1.msra.mxu0 %v868
    %920 = vmatprep.subr.mxu0 %v874
    %921 = vmatpush1.msra.mxu0 %v873
    %922 = vmatprep.subr.mxu0 %v879
    %923 = vmatpush1.msra.mxu0 %v878
    %924 = vmatprep.subr.mxu0 %v884
    %925 = vmatpush1.msra.mxu0 %v883
    %926 = vmatprep.subr.mxu0 %v889
    %927 = vmatpush1.msra.mxu0 %v888
    %928 = vmatprep.subr.mxu0 %v894
    %929 = vmatpush1.msra.mxu0 %v893
    %930 = vmatprep.subr.mxu0 0.0
    %931 = vmatpush1.msra.mxu0 0.0
    %932 = vmatprep.subr.mxu0 0.0
    %933 = vmatpush1.msra.mxu0 0.0
    %934 = vmatprep.subr.mxu0 0.0
    %935 = vmatpush1.msra.mxu0 0.0
    %936 = vmatprep.subr.mxu0 0.0
    %937 = vmatpush1.msra.mxu0 0.0
    %938 = vmatprep.subr.mxu0 0.0
    %939 = vmatpush1.msra.mxu0 0.0
    %940 = vmatprep.subr.mxu0 0.0
    %941 = vmatpush1.msra.mxu0 0.0
    %942 = vmatprep.subr.mxu0 0.0
    %943 = vmatpush1.msra.mxu0 0.0
    %944 = vmatprep.subr.mxu0 0.0
    %945 = vmatpush1.msra.mxu0 0.0
    %946 = vmatprep.subr.mxu0 0.0
    %947 = vmatpush1.msra.mxu0 0.0
    %948 = vmatprep.subr.mxu0 0.0
    %949 = vmatpush1.msra.mxu0 0.0
    %950 = vmatprep.subr.mxu0 0.0
    %951 = vmatpush1.msra.mxu0 0.0
    %952 = vmatprep.subr.mxu0 0.0
    %953 = vmatpush1.msra.mxu0 0.0
    %954 = vmatprep.subr.mxu0 0.0
    %955 = vmatpush1.msra.mxu0 0.0
    %956 = vmatprep.subr.mxu0 0.0
    %957 = vmatpush1.msra.mxu0 0.0
    %958 = vmatprep.subr.mxu0 0.0
    %959 = vmatpush1.msra.mxu0 0.0
    %960 = vmatprep.subr.mxu0 0.0
    %961 = vmatpush1.msra.mxu0 0.0
    %962 = vmatprep.mubr.f32.mxu0 0.0
    %963 = vmatmul.mubr.f32.gmra.mrb[0].mxu0 %v817
    %v964 = vpop.f32.mrb[0].mxu0
    %v965 = vadd.f32 0.0, %v964
    %v966 = vpop.f32.mrb[0].mxu0
    %v967 = vadd.f32 0.0, %v966
    %968 = vdwg.mxu0
    %969 = vmatprep.subr.mxu0 %v821
    %970 = vmatpush1.msra.mxu0 %v820
    %971 = vmatprep.subr.mxu0 %v826
    %972 = vmatpush1.msra.mxu0 %v825
    %973 = vmatprep.subr.mxu0 %v831
    %974 = vmatpush1.msra.mxu0 %v830
    %975 = vmatprep.subr.mxu0 %v836
    %976 = vmatpush1.msra.mxu0 %v835
    %977 = vmatprep.subr.mxu0 %v841
    %978 = vmatpush1.msra.mxu0 %v840
    %979 = vmatprep.subr.mxu0 %v846
    %980 = vmatpush1.msra.mxu0 %v845
    %981 = vmatprep.subr.mxu0 %v851
    %982 = vmatpush1.msra.mxu0 %v850
    %983 = vmatprep.subr.mxu0 %v856
    %984 = vmatpush1.msra.mxu0 %v855
    %985 = vmatprep.subr.mxu0 %v861
    %986 = vmatpush1.msra.mxu0 %v860
    %987 = vmatprep.subr.mxu0 %v866
    %988 = vmatpush1.msra.mxu0 %v865
    %989 = vmatprep.subr.mxu0 %v871
    %990 = vmatpush1.msra.mxu0 %v870
    %991 = vmatprep.subr.mxu0 %v876
    %992 = vmatpush1.msra.mxu0 %v875
    %993 = vmatprep.subr.mxu0 %v881
    %994 = vmatpush1.msra.mxu0 %v880
    %995 = vmatprep.subr.mxu0 %v886
    %996 = vmatpush1.msra.mxu0 %v885
    %997 = vmatprep.subr.mxu0 %v891
    %998 = vmatpush1.msra.mxu0 %v890
    %999 = vmatprep.subr.mxu0 %v896
    %1000 = vmatpush1.msra.mxu0 %v895
    %1001 = vmatprep.subr.mxu0 0.0
    %1002 = vmatpush1.msra.mxu0 0.0
    %1003 = vmatprep.subr.mxu0 0.0
    %1004 = vmatpush1.msra.mxu0 0.0
    %1005 = vmatprep.subr.mxu0 0.0
    %1006 = vmatpush1.msra.mxu0 0.0
    %1007 = vmatprep.subr.mxu0 0.0
    %1008 = vmatpush1.msra.mxu0 0.0
    %1009 = vmatprep.subr.mxu0 0.0
    %1010 = vmatpush1.msra.mxu0 0.0
    %1011 = vmatprep.subr.mxu0 0.0
    %1012 = vmatpush1.msra.mxu0 0.0
    %1013 = vmatprep.subr.mxu0 0.0
    %1014 = vmatpush1.msra.mxu0 0.0
    %1015 = vmatprep.subr.mxu0 0.0
    %1016 = vmatpush1.msra.mxu0 0.0
    %1017 = vmatprep.subr.mxu0 0.0
    %1018 = vmatpush1.msra.mxu0 0.0
    %1019 = vmatprep.subr.mxu0 0.0
    %1020 = vmatpush1.msra.mxu0 0.0
    %1021 = vmatprep.subr.mxu0 0.0
    %1022 = vmatpush1.msra.mxu0 0.0
    %1023 = vmatprep.subr.mxu0 0.0
    %1024 = vmatpush1.msra.mxu0 0.0
    %1025 = vmatprep.subr.mxu0 0.0
    %1026 = vmatpush1.msra.mxu0 0.0
    %1027 = vmatprep.subr.mxu0 0.0
    %1028 = vmatpush1.msra.mxu0 0.0
    %1029 = vmatprep.subr.mxu0 0.0
    %1030 = vmatpush1.msra.mxu0 0.0
    %1031 = vmatprep.subr.mxu0 0.0
    %1032 = vmatpush1.msra.mxu0 0.0
    %1033 = vmatprep.mubr.f32.mxu0 0.0
    %1034 = vmatmul.mubr.f32.gmra.mrb[0].mxu0 %v817
    %v1035 = vpop.f32.mrb[0].mxu0
    %v1036 = vadd.f32 0.0, %v1035
    %v1037 = vpop.f32.mrb[0].mxu0
    %v1038 = vadd.f32 0.0, %v1037
    %1039 = vdwg.mxu0
    %1040 = vmatprep.subr.mxu0 0.0
    %1041 = vmatpush1.msra.mxu0 %v822
    %1042 = vmatprep.subr.mxu0 0.0
    %1043 = vmatpush1.msra.mxu0 %v827
    %1044 = vmatprep.subr.mxu0 0.0
    %1045 = vmatpush1.msra.mxu0 %v832
    %1046 = vmatprep.subr.mxu0 0.0
    %1047 = vmatpush1.msra.mxu0 %v837
    %1048 = vmatprep.subr.mxu0 0.0
    %1049 = vmatpush1.msra.mxu0 %v842
    %1050 = vmatprep.subr.mxu0 0.0
    %1051 = vmatpush1.msra.mxu0 %v847
    %1052 = vmatprep.subr.mxu0 0.0
    %1053 = vmatpush1.msra.mxu0 %v852
    %1054 = vmatprep.subr.mxu0 0.0
    %1055 = vmatpush1.msra.mxu0 %v857
    %1056 = vmatprep.subr.mxu0 0.0
    %1057 = vmatpush1.msra.mxu0 %v862
    %1058 = vmatprep.subr.mxu0 0.0
    %1059 = vmatpush1.msra.mxu0 %v867
    %1060 = vmatprep.subr.mxu0 0.0
    %1061 = vmatpush1.msra.mxu0 %v872
    %1062 = vmatprep.subr.mxu0 0.0
    %1063 = vmatpush1.msra.mxu0 %v877
    %1064 = vmatprep.subr.mxu0 0.0
    %1065 = vmatpush1.msra.mxu0 %v882
    %1066 = vmatprep.subr.mxu0 0.0
    %1067 = vmatpush1.msra.mxu0 %v887
    %1068 = vmatprep.subr.mxu0 0.0
    %1069 = vmatpush1.msra.mxu0 %v892
    %1070 = vmatprep.subr.mxu0 0.0
    %1071 = vmatpush1.msra.mxu0 %v897
    %1072 = vmatprep.subr.mxu0 0.0
    %1073 = vmatpush1.msra.mxu0 0.0
    %1074 = vmatprep.subr.mxu0 0.0
    %1075 = vmatpush1.msra.mxu0 0.0
    %1076 = vmatprep.subr.mxu0 0.0
    %1077 = vmatpush1.msra.mxu0 0.0
    %1078 = vmatprep.subr.mxu0 0.0
    %1079 = vmatpush1.msra.mxu0 0.0
    %1080 = vmatprep.subr.mxu0 0.0
    %1081 = vmatpush1.msra.mxu0 0.0
    %1082 = vmatprep.subr.mxu0 0.0
    %1083 = vmatpush1.msra.mxu0 0.0
    %1084 = vmatprep.subr.mxu0 0.0
    %1085 = vmatpush1.msra.mxu0 0.0
    %1086 = vmatprep.subr.mxu0 0.0
    %1087 = vmatpush1.msra.mxu0 0.0
    %1088 = vmatprep.subr.mxu0 0.0
    %1089 = vmatpush1.msra.mxu0 0.0
    %1090 = vmatprep.subr.mxu0 0.0
    %1091 = vmatpush1.msra.mxu0 0.0
    %1092 = vmatprep.subr.mxu0 0.0
    %1093 = vmatpush1.msra.mxu0 0.0
    %1094 = vmatprep.subr.mxu0 0.0
    %1095 = vmatpush1.msra.mxu0 0.0
    %1096 = vmatprep.subr.mxu0 0.0
    %1097 = vmatpush1.msra.mxu0 0.0
    %1098 = vmatprep.subr.mxu0 0.0
    %1099 = vmatpush1.msra.mxu0 0.0
    %1100 = vmatprep.subr.mxu0 0.0
    %1101 = vmatpush1.msra.mxu0 0.0
    %1102 = vmatprep.subr.mxu0 0.0
    %1103 = vmatpush1.msra.mxu0 0.0
    %1104 = vmatprep.mubr.f32.mxu0 0.0
    %1105 = vmatmul.mubr.f32.gmra.mrb[0].mxu0 %v817
    %v1106 = vpop.f32.mrb[0].mxu0
    %v1107 = vadd.f32 0.0, %v1106
    %v1108 = vpop.f32.mrb[0].mxu0
    %1109 = vdwg.mxu0
    %v1110 = vadd.f32 %v811, %v965
    %v1111 = vadd.f32 %v812, %v967
    %v1112 = vadd.f32 %v813, %v1036
    %v1113 = vadd.f32 %v814, %v1038
    %v1114 = vadd.f32 %v815, %v1107
    %v1115 = vxor.u32 %v1110, 2147483648
    %v1116 = vmul.f32 %v1115, 1.442695
    %v1117 = vpow.pop %v1116
    %v1118 = vadd.f32 %v1117, 1.0
    %v1119 = vrcp.pop %v1118
    %v1120 = vmul.f32 1.0, %v1119
    %v1121 = vxor.u32 %v1111, 2147483648
    %v1122 = vmul.f32 %v1121, 1.442695
    %v1123 = vpow.pop %v1122
    %v1124 = vadd.f32 %v1123, 1.0
    %v1125 = vrcp.pop %v1124
    %v1126 = vmul.f32 1.0, %v1125
    %v1127 = vxor.u32 %v1112, 2147483648
    %v1128 = vmul.f32 %v1127, 1.442695
    %v1129 = vpow.pop %v1128
    %v1130 = vadd.f32 %v1129, 1.0
    %v1131 = vrcp.pop %v1130
    %v1132 = vmul.f32 1.0, %v1131
    %v1133 = vtanh.pop %v1113
    %v1134 = vxor.u32 %v1114, 2147483648
    %v1135 = vmul.f32 %v1134, 1.442695
    %v1136 = vpow.pop %v1135
    %v1137 = vadd.f32 %v1136, 1.0
    %v1138 = vrcp.pop %v1137
    %v1139 = vmul.f32 1.0, %v1138
    %v1140 = vmul.f32 %v1120, %v1133
    %v1141 = vld [vmem:[#allocation3] sm:$0xff]
    %v1142 = vmul.f32 %v1132, %v1141
    %v1143 = vadd.f32 %v1140, %v1142
    %v1144 = vtanh.pop %v1143
    %v1145 = vmul.f32 %v1126, %v1144
    %v1146 = vmul.f32 %v1139, %v1145
    %v1147 = vsub.f32 1.0, %v1139
    %v1148 = vmul.f32 %v1147, %v816
    %v1149 = vadd.f32 %v1146, %v1148
    %1150 = vst [vmem:[#allocation3] sm:$0xff] %v1143
    %1151 = vst [vmem:[#allocation4] sm:$0xff] %v1149
    %s1152 = scalar_lea.vmem [#allocation11], 8
    %1153 = vst [vmem:[%s1152] sm:$0xff] %v1149
    %s1154 = smul.u32 2, 6
    %s1155 = smul.addr %s1154, 8
    %s1156 = scalar_lea.vmem [#allocation2], %s1155
    %v1157 = vld [vmem:[%s1156] sm:$0xff]
    %v1158 = vld [vmem:[%s1156 + $0x8] sm:$0xff]
    %v1159 = vld [vmem:[%s1156 + $0x10] sm:$0xff]
    %v1160 = vld [vmem:[%s1156 + $0x18] sm:$0xff]
    %v1161 = vld [vmem:[%s1156 + $0x20] sm:$0xff]
    %v1162 = vld [vmem:[%s1156 + $0x28] sm:$0xff]
    %v1163 = vld [vmem:[#allocation4] sm:$0xff]
    %v1164 = vld [vmem:[#allocation10] sm:$0xff]
    %v1165 = vld [vmem:[#allocation10 + $0x8] sm:$0xff]
    %v1166 = vld [vmem:[#allocation10 + $0x10] sm:$0xff]
    %v1167 = vld [vmem:[#allocation10 + $0x18] sm:$0xff]
    %v1168 = vld [vmem:[#allocation10 + $0x20] sm:$0xff]
    %v1169 = vld [vmem:[#allocation10 + $0x28] sm:$0xff]
    %v1170 = vld [vmem:[#allocation10 + $0x30] sm:$0xff]
    %v1171 = vld [vmem:[#allocation10 + $0x38] sm:$0xff]
    %v1172 = vld [vmem:[#allocation10 + $0x40] sm:$0xff]
    %v1173 = vld [vmem:[#allocation10 + $0x48] sm:$0xff]
    %v1174 = vld [vmem:[#allocation10 + $0x50] sm:$0xff]
    %v1175 = vld [vmem:[#allocation10 + $0x58] sm:$0xff]
    %v1176 = vld [vmem:[#allocation10 + $0x60] sm:$0xff]
    %v1177 = vld [vmem:[#allocation10 + $0x68] sm:$0xff]
    %v1178 = vld [vmem:[#allocation10 + $0x70] sm:$0xff]
    %v1179 = vld [vmem:[#allocation10 + $0x78] sm:$0xff]
    %v1180 = vld [vmem:[#allocation10 + $0x80] sm:$0xff]
    %v1181 = vld [vmem:[#allocation10 + $0x88] sm:$0xff]
    %v1182 = vld [vmem:[#allocation10 + $0x90] sm:$0xff]
    %v1183 = vld [vmem:[#allocation10 + $0x98] sm:$0xff]
    %v1184 = vld [vmem:[#allocation10 + $0xa0] sm:$0xff]
    %v1185 = vld [vmem:[#allocation10 + $0xa8] sm:$0xff]
    %v1186 = vld [vmem:[#allocation10 + $0xb0] sm:$0xff]
    %v1187 = vld [vmem:[#allocation10 + $0xb8] sm:$0xff]
    %v1188 = vld [vmem:[#allocation10 + $0xc0] sm:$0xff]
    %v1189 = vld [vmem:[#allocation10 + $0xc8] sm:$0xff]
    %v1190 = vld [vmem:[#allocation10 + $0xd0] sm:$0xff]
    %v1191 = vld [vmem:[#allocation10 + $0xd8] sm:$0xff]
    %v1192 = vld [vmem:[#allocation10 + $0xe0] sm:$0xff]
    %v1193 = vld [vmem:[#allocation10 + $0xe8] sm:$0xff]
    %v1194 = vld [vmem:[#allocation10 + $0xf0] sm:$0xff]
    %v1195 = vld [vmem:[#allocation10 + $0xf8] sm:$0xff]
    %v1196 = vld [vmem:[#allocation10 + $0x100] sm:$0xff]
    %v1197 = vld [vmem:[#allocation10 + $0x108] sm:$0xff]
    %v1198 = vld [vmem:[#allocation10 + $0x110] sm:$0xff]
    %v1199 = vld [vmem:[#allocation10 + $0x118] sm:$0xff]
    %v1200 = vld [vmem:[#allocation10 + $0x120] sm:$0xff]
    %v1201 = vld [vmem:[#allocation10 + $0x128] sm:$0xff]
    %v1202 = vld [vmem:[#allocation10 + $0x130] sm:$0xff]
    %v1203 = vld [vmem:[#allocation10 + $0x138] sm:$0xff]
    %v1204 = vld [vmem:[#allocation10 + $0x140] sm:$0xff]
    %v1205 = vld [vmem:[#allocation10 + $0x148] sm:$0xff]
    %v1206 = vld [vmem:[#allocation10 + $0x150] sm:$0xff]
    %v1207 = vld [vmem:[#allocation10 + $0x158] sm:$0xff]
    %v1208 = vld [vmem:[#allocation10 + $0x160] sm:$0xff]
    %v1209 = vld [vmem:[#allocation10 + $0x168] sm:$0xff]
    %v1210 = vld [vmem:[#allocation10 + $0x170] sm:$0xff]
    %v1211 = vld [vmem:[#allocation10 + $0x178] sm:$0xff]
    %v1212 = vld [vmem:[#allocation10 + $0x180] sm:$0xff]
    %v1213 = vld [vmem:[#allocation10 + $0x188] sm:$0xff]
    %v1214 = vld [vmem:[#allocation10 + $0x190] sm:$0xff]
    %v1215 = vld [vmem:[#allocation10 + $0x198] sm:$0xff]
    %v1216 = vld [vmem:[#allocation10 + $0x1a0] sm:$0xff]
    %v1217 = vld [vmem:[#allocation10 + $0x1a8] sm:$0xff]
    %v1218 = vld [vmem:[#allocation10 + $0x1b0] sm:$0xff]
    %v1219 = vld [vmem:[#allocation10 + $0x1b8] sm:$0xff]
    %v1220 = vld [vmem:[#allocation10 + $0x1c0] sm:$0xff]
    %v1221 = vld [vmem:[#allocation10 + $0x1c8] sm:$0xff]
    %v1222 = vld [vmem:[#allocation10 + $0x1d0] sm:$0xff]
    %v1223 = vld [vmem:[#allocation10 + $0x1d8] sm:$0xff]
    %v1224 = vld [vmem:[#allocation10 + $0x1e0] sm:$0xff]
    %v1225 = vld [vmem:[#allocation10 + $0x1e8] sm:$0xff]
    %v1226 = vld [vmem:[#allocation10 + $0x1f0] sm:$0xff]
    %v1227 = vld [vmem:[#allocation10 + $0x1f8] sm:$0xff]
    %v1228 = vld [vmem:[#allocation10 + $0x200] sm:$0xff]
    %v1229 = vld [vmem:[#allocation10 + $0x208] sm:$0xff]
    %v1230 = vld [vmem:[#allocation10 + $0x210] sm:$0xff]
    %v1231 = vld [vmem:[#allocation10 + $0x218] sm:$0xff]
    %v1232 = vld [vmem:[#allocation10 + $0x220] sm:$0xff]
    %v1233 = vld [vmem:[#allocation10 + $0x228] sm:$0xff]
    %v1234 = vld [vmem:[#allocation10 + $0x230] sm:$0xff]
    %v1235 = vld [vmem:[#allocation10 + $0x238] sm:$0xff]
    %v1236 = vld [vmem:[#allocation10 + $0x240] sm:$0xff]
    %v1237 = vld [vmem:[#allocation10 + $0x248] sm:$0xff]
    %v1238 = vld [vmem:[#allocation10 + $0x250] sm:$0xff]
    %v1239 = vld [vmem:[#allocation10 + $0x258] sm:$0xff]
    %v1240 = vld [vmem:[#allocation10 + $0x260] sm:$0xff]
    %v1241 = vld [vmem:[#allocation10 + $0x268] sm:$0xff]
    %v1242 = vld [vmem:[#allocation10 + $0x270] sm:$0xff]
    %v1243 = vld [vmem:[#allocation10 + $0x278] sm:$0xff]
    %1244 = vmatprep.subr.mxu0 %v1165
    %1245 = vmatpush1.msra.mxu0 %v1164
    %1246 = vmatprep.subr.mxu0 %v1170
    %1247 = vmatpush1.msra.mxu0 %v1169
    %1248 = vmatprep.subr.mxu0 %v1175
    %1249 = vmatpush1.msra.mxu0 %v1174
    %1250 = vmatprep.subr.mxu0 %v1180
    %1251 = vmatpush1.msra.mxu0 %v1179
    %1252 = vmatprep.subr.mxu0 %v1185
    %1253 = vmatpush1.msra.mxu0 %v1184
    %1254 = vmatprep.subr.mxu0 %v1190
    %1255 = vmatpush1.msra.mxu0 %v1189
    %1256 = vmatprep.subr.mxu0 %v1195
    %1257 = vmatpush1.msra.mxu0 %v1194
    %1258 = vmatprep.subr.mxu0 %v1200
    %1259 = vmatpush1.msra.mxu0 %v1199
    %1260 = vmatprep.subr.mxu0 %v1205
    %1261 = vmatpush1.msra.mxu0 %v1204
    %1262 = vmatprep.subr.mxu0 %v1210
    %1263 = vmatpush1.msra.mxu0 %v1209
    %1264 = vmatprep.subr.mxu0 %v1215
    %1265 = vmatpush1.msra.mxu0 %v1214
    %1266 = vmatprep.subr.mxu0 %v1220
    %1267 = vmatpush1.msra.mxu0 %v1219
    %1268 = vmatprep.subr.mxu0 %v1225
    %1269 = vmatpush1.msra.mxu0 %v1224
    %1270 = vmatprep.subr.mxu0 %v1230
    %1271 = vmatpush1.msra.mxu0 %v1229
    %1272 = vmatprep.subr.mxu0 %v1235
    %1273 = vmatpush1.msra.mxu0 %v1234
    %1274 = vmatprep.subr.mxu0 %v1240
    %1275 = vmatpush1.msra.mxu0 %v1239
    %1276 = vmatprep.subr.mxu0 0.0
    %1277 = vmatpush1.msra.mxu0 0.0
    %1278 = vmatprep.subr.mxu0 0.0
    %1279 = vmatpush1.msra.mxu0 0.0
    %1280 = vmatprep.subr.mxu0 0.0
    %1281 = vmatpush1.msra.mxu0 0.0
    %1282 = vmatprep.subr.mxu0 0.0
    %1283 = vmatpush1.msra.mxu0 0.0
    %1284 = vmatprep.subr.mxu0 0.0
    %1285 = vmatpush1.msra.mxu0 0.0
    %1286 = vmatprep.subr.mxu0 0.0
    %1287 = vmatpush1.msra.mxu0 0.0
    %1288 = vmatprep.subr.mxu0 0.0
    %1289 = vmatpush1.msra.mxu0 0.0
    %1290 = vmatprep.subr.mxu0 0.0
    %1291 = vmatpush1.msra.mxu0 0.0
    %1292 = vmatprep.subr.mxu0 0.0
    %1293 = vmatpush1.msra.mxu0 0.0
    %1294 = vmatprep.subr.mxu0 0.0
    %1295 = vmatpush1.msra.mxu0 0.0
    %1296 = vmatprep.subr.mxu0 0.0
    %1297 = vmatpush1.msra.mxu0 0.0
    %1298 = vmatprep.subr.mxu0 0.0
    %1299 = vmatpush1.msra.mxu0 0.0
    %1300 = vmatprep.subr.mxu0 0.0
    %1301 = vmatpush1.msra.mxu0 0.0
    %1302 = vmatprep.subr.mxu0 0.0
    %1303 = vmatpush1.msra.mxu0 0.0
    %1304 = vmatprep.subr.mxu0 0.0
    %1305 = vmatpush1.msra.mxu0 0.0
    %1306 = vmatprep.subr.mxu0 0.0
    %1307 = vmatpush1.msra.mxu0 0.0
    %1308 = vmatprep.mubr.f32.mxu0 0.0
    %1309 = vmatmul.mubr.f32.gmra.mrb[0].mxu0 %v1163
    %v1310 = vpop.f32.mrb[0].mxu0
    %v1311 = vadd.f32 0.0, %v1310
    %v1312 = vpop.f32.mrb[0].mxu0
    %v1313 = vadd.f32 0.0, %v1312
    %1314 = vdwg.mxu0
    %1315 = vmatprep.subr.mxu0 %v1167
    %1316 = vmatpush1.msra.mxu0 %v1166
    %1317 = vmatprep.subr.mxu0 %v1172
    %1318 = vmatpush1.msra.mxu0 %v1171
    %1319 = vmatprep.subr.mxu0 %v1177
    %1320 = vmatpush1.msra.mxu0 %v1176
    %1321 = vmatprep.subr.mxu0 %v1182
    %1322 = vmatpush1.msra.mxu0 %v1181
    %1323 = vmatprep.subr.mxu0 %v1187
    %1324 = vmatpush1.msra.mxu0 %v1186
    %1325 = vmatprep.subr.mxu0 %v1192
    %1326 = vmatpush1.msra.mxu0 %v1191
    %1327 = vmatprep.subr.mxu0 %v1197
    %1328 = vmatpush1.msra.mxu0 %v1196
    %1329 = vmatprep.subr.mxu0 %v1202
    %1330 = vmatpush1.msra.mxu0 %v1201
    %1331 = vmatprep.subr.mxu0 %v1207
    %1332 = vmatpush1.msra.mxu0 %v1206
    %1333 = vmatprep.subr.mxu0 %v1212
    %1334 = vmatpush1.msra.mxu0 %v1211
    %1335 = vmatprep.subr.mxu0 %v1217
    %1336 = vmatpush1.msra.mxu0 %v1216
    %1337 = vmatprep.subr.mxu0 %v1222
    %1338 = vmatpush1.msra.mxu0 %v1221
    %1339 = vmatprep.subr.mxu0 %v1227
    %1340 = vmatpush1.msra.mxu0 %v1226
    %1341 = vmatprep.subr.mxu0 %v1232
    %1342 = vmatpush1.msra.mxu0 %v1231
    %1343 = vmatprep.subr.mxu0 %v1237
    %1344 = vmatpush1.msra.mxu0 %v1236
    %1345 = vmatprep.subr.mxu0 %v1242
    %1346 = vmatpush1.msra.mxu0 %v1241
    %1347 = vmatprep.subr.mxu0 0.0
    %1348 = vmatpush1.msra.mxu0 0.0
    %1349 = vmatprep.subr.mxu0 0.0
    %1350 = vmatpush1.msra.mxu0 0.0
    %1351 = vmatprep.subr.mxu0 0.0
    %1352 = vmatpush1.msra.mxu0 0.0
    %1353 = vmatprep.subr.mxu0 0.0
    %1354 = vmatpush1.msra.mxu0 0.0
    %1355 = vmatprep.subr.mxu0 0.0
    %1356 = vmatpush1.msra.mxu0 0.0
    %1357 = vmatprep.subr.mxu0 0.0
    %1358 = vmatpush1.msra.mxu0 0.0
    %1359 = vmatprep.subr.mxu0 0.0
    %1360 = vmatpush1.msra.mxu0 0.0
    %1361 = vmatprep.subr.mxu0 0.0
    %1362 = vmatpush1.msra.mxu0 0.0
    %1363 = vmatprep.subr.mxu0 0.0
    %1364 = vmatpush1.msra.mxu0 0.0
    %1365 = vmatprep.subr.mxu0 0.0
    %1366 = vmatpush1.msra.mxu0 0.0
    %1367 = vmatprep.subr.mxu0 0.0
    %1368 = vmatpush1.msra.mxu0 0.0
    %1369 = vmatprep.subr.mxu0 0.0
    %1370 = vmatpush1.msra.mxu0 0.0
    %1371 = vmatprep.subr.mxu0 0.0
    %1372 = vmatpush1.msra.mxu0 0.0
    %1373 = vmatprep.subr.mxu0 0.0
    %1374 = vmatpush1.msra.mxu0 0.0
    %1375 = vmatprep.subr.mxu0 0.0
    %1376 = vmatpush1.msra.mxu0 0.0
    %1377 = vmatprep.subr.mxu0 0.0
    %1378 = vmatpush1.msra.mxu0 0.0
    %1379 = vmatprep.mubr.f32.mxu0 0.0
    %1380 = vmatmul.mubr.f32.gmra.mrb[0].mxu0 %v1163
    %v1381 = vpop.f32.mrb[0].mxu0
    %v1382 = vadd.f32 0.0, %v1381
    %v1383 = vpop.f32.mrb[0].mxu0
    %v1384 = vadd.f32 0.0, %v1383
    %1385 = vdwg.mxu0
    %1386 = vmatprep.subr.mxu0 0.0
    %1387 = vmatpush1.msra.mxu0 %v1168
    %1388 = vmatprep.subr.mxu0 0.0
    %1389 = vmatpush1.msra.mxu0 %v1173
    %1390 = vmatprep.subr.mxu0 0.0
    %1391 = vmatpush1.msra.mxu0 %v1178
    %1392 = vmatprep.subr.mxu0 0.0
    %1393 = vmatpush1.msra.mxu0 %v1183
    %1394 = vmatprep.subr.mxu0 0.0
    %1395 = vmatpush1.msra.mxu0 %v1188
    %1396 = vmatprep.subr.mxu0 0.0
    %1397 = vmatpush1.msra.mxu0 %v1193
    %1398 = vmatprep.subr.mxu0 0.0
    %1399 = vmatpush1.msra.mxu0 %v1198
    %1400 = vmatprep.subr.mxu0 0.0
    %1401 = vmatpush1.msra.mxu0 %v1203
    %1402 = vmatprep.subr.mxu0 0.0
    %1403 = vmatpush1.msra.mxu0 %v1208
    %1404 = vmatprep.subr.mxu0 0.0
    %1405 = vmatpush1.msra.mxu0 %v1213
    %1406 = vmatprep.subr.mxu0 0.0
    %1407 = vmatpush1.msra.mxu0 %v1218
    %1408 = vmatprep.subr.mxu0 0.0
    %1409 = vmatpush1.msra.mxu0 %v1223
    %1410 = vmatprep.subr.mxu0 0.0
    %1411 = vmatpush1.msra.mxu0 %v1228
    %1412 = vmatprep.subr.mxu0 0.0
    %1413 = vmatpush1.msra.mxu0 %v1233
    %1414 = vmatprep.subr.mxu0 0.0
    %1415 = vmatpush1.msra.mxu0 %v1238
    %1416 = vmatprep.subr.mxu0 0.0
    %1417 = vmatpush1.msra.mxu0 %v1243
    %1418 = vmatprep.subr.mxu0 0.0
    %1419 = vmatpush1.msra.mxu0 0.0
    %1420 = vmatprep.subr.mxu0 0.0
    %1421 = vmatpush1.msra.mxu0 0.0
    %1422 = vmatprep.subr.mxu0 0.0
    %1423 = vmatpush1.msra.mxu0 0.0
    %1424 = vmatprep.subr.mxu0 0.0
    %1425 = vmatpush1.msra.mxu0 0.0
    %1426 = vmatprep.subr.mxu0 0.0
    %1427 = vmatpush1.msra.mxu0 0.0
    %1428 = vmatprep.subr.mxu0 0.0
    %1429 = vmatpush1.msra.mxu0 0.0
    %1430 = vmatprep.subr.mxu0 0.0
    %1431 = vmatpush1.msra.mxu0 0.0
    %1432 = vmatprep.subr.mxu0 0.0
    %1433 = vmatpush1.msra.mxu0 0.0
    %1434 = vmatprep.subr.mxu0 0.0
    %1435 = vmatpush1.msra.mxu0 0.0
    %1436 = vmatprep.subr.mxu0 0.0
    %1437 = vmatpush1.msra.mxu0 0.0
    %1438 = vmatprep.subr.mxu0 0.0
    %1439 = vmatpush1.msra.mxu0 0.0
    %1440 = vmatprep.subr.mxu0 0.0
    %1441 = vmatpush1.msra.mxu0 0.0
    %1442 = vmatprep.subr.mxu0 0.0
    %1443 = vmatpush1.msra.mxu0 0.0
    %1444 = vmatprep.subr.mxu0 0.0
    %1445 = vmatpush1.msra.mxu0 0.0
    %1446 = vmatprep.subr.mxu0 0.0
    %1447 = vmatpush1.msra.mxu0 0.0
    %1448 = vmatprep.subr.mxu0 0.0
    %1449 = vmatpush1.msra.mxu0 0.0
    %1450 = vmatprep.mubr.f32.mxu0 0.0
    %1451 = vmatmul.mubr.f32.gmra.mrb[0].mxu0 %v1163
    %v1452 = vpop.f32.mrb[0].mxu0
    %v1453 = vadd.f32 0.0, %v1452
    %v1454 = vpop.f32.mrb[0].mxu0
    %1455 = vdwg.mxu0
    %v1456 = vadd.f32 %v1157, %v1311
    %v1457 = vadd.f32 %v1158, %v1313
    %v1458 = vadd.f32 %v1159, %v1382
    %v1459 = vadd.f32 %v1160, %v1384
    %v1460 = vadd.f32 %v1161, %v1453
    %v1461 = vxor.u32 %v1456, 2147483648
    %v1462 = vmul.f32 %v1461, 1.442695
    %v1463 = vpow.pop %v1462
    %v1464 = vadd.f32 %v1463, 1.0
    %v1465 = vrcp.pop %v1464
    %v1466 = vmul.f32 1.0, %v1465
    %v1467 = vxor.u32 %v1457, 2147483648
    %v1468 = vmul.f32 %v1467, 1.442695
    %v1469 = vpow.pop %v1468
    %v1470 = vadd.f32 %v1469, 1.0
    %v1471 = vrcp.pop %v1470
    %v1472 = vmul.f32 1.0, %v1471
    %v1473 = vxor.u32 %v1458, 2147483648
    %v1474 = vmul.f32 %v1473, 1.442695
    %v1475 = vpow.pop %v1474
    %v1476 = vadd.f32 %v1475, 1.0
    %v1477 = vrcp.pop %v1476
    %v1478 = vmul.f32 1.0, %v1477
    %v1479 = vtanh.pop %v1459
    %v1480 = vxor.u32 %v1460, 2147483648
    %v1481 = vmul.f32 %v1480, 1.442695
    %v1482 = vpow.pop %v1481
    %v1483 = vadd.f32 %v1482, 1.0
    %v1484 = vrcp.pop %v1483
    %v1485 = vmul.f32 1.0, %v1484
    %v1486 = vmul.f32 %v1466, %v1479
    %v1487 = vld [vmem:[#allocation3] sm:$0xff]
    %v1488 = vmul.f32 %v1478, %v1487
    %v1489 = vadd.f32 %v1486, %v1488
    %v1490 = vtanh.pop %v1489
    %v1491 = vmul.f32 %v1472, %v1490
    %v1492 = vmul.f32 %v1485, %v1491
    %v1493 = vsub.f32 1.0, %v1485
    %v1494 = vmul.f32 %v1493, %v1162
    %v1495 = vadd.f32 %v1492, %v1494
    %1496 = vst [vmem:[#allocation3] sm:$0xff] %v1489
    %1497 = vst [vmem:[#allocation4] sm:$0xff] %v1495
    %s1498 = scalar_lea.vmem [#allocation11], 16
    %1499 = vst [vmem:[%s1498] sm:$0xff] %v1495
    // Predicated region
    $region34: #{tpu_custom_call.1} parent=1 // pred_check
      _
    $region35: #{tpu_custom_call.1} parent=1 // pred_check_branch
      %1501 = sbr.rel (0) target = $region37
    $region36: #{tpu_custom_call.1} parent=1 // pred_region
      %s1503 = ssub.s32 384, 384
      %1504 = vsyncadd [#allocation7], %s1503
      %s1505 = sshll.u32 [#allocation11], 4
      %s1506 = int_to_ptr.vmem [resolvable:$true] %s1505
      %1511 = dma.vmem_to_hbm [thread:$0]  %s1506, 384, %s4, [#allocation7], 128, 128, 8
    $region37: #{tpu_custom_call.1} parent=1 // pred_fallthru
      _
    // Predicated region
    $region38: #{tpu_custom_call.1} parent=1 // pred_check
      _
    $region39: #{tpu_custom_call.1} parent=1 // pred_check_branch
      %1513 = sbr.rel (0) target = $region41
    $region40: #{tpu_custom_call.1} parent=1 // pred_region
      %1514 = dma.done [#allocation7], 384
    $region41: #{tpu_custom_call.1} parent=1 // pred_fallthru
      _
    %1515 = vsyncpa [#allocation6], 1
    %1516 = vsyncpa [#allocation9], 1
    %1517 = vsyncpa [#allocation7], 1

</llo_original>
